<compile_context>
chip_gen: v7x
topology: tpu7x:2x2x1
jax: 0.10.0
libtpu: 0.0.40
codegen_flags: <defaults>
</compile_context>

<pallas_src>
import functools
import math

import jax
import jax.numpy as jnp
from jax import lax
from jax.experimental import pallas as pl
from jax.experimental.pallas import tpu as pltpu


def _round_up(x, m):
    return ((x + m - 1) // m) * m


def _gru_chunk_kernel(
    gi_ref,      # (Tb, Bb, 3*Hp)  precomputed input-side gates [r|z|n], biases folded
    wh_ref,      # (Hp, 3*Hp)      recurrent weights, gate blocks at 128-aligned offsets
    bhn_ref,     # (1, Hp)         recurrent bias of the n gate (stays inside r*(...))
    y_ref,       # (Tb, Bb, Hp)    relu(h_t) chunk (lane-dense output)
    hid_ref,     # (1, Bb, Hp)     final hidden state (written on last time chunk only)
    h_scratch,   # VMEM (Bb, Hp)   persistent recurrent state
    *,
    tb, hp,
):
    t = pl.program_id(1)

    # New batch tile starts a fresh recurrence.
    @pl.when(t == 0)
    def _():
        h_scratch[...] = jnp.zeros_like(h_scratch)

    wh = wh_ref[...]
    bhn = bhn_ref[...]

    def step(s, h):
        gi_s = gi_ref[s]                                              # (Bb, 3Hp)
        # Single fused recurrent matmul for all three gates (one MXU issue).
        gh = jnp.dot(h, wh, preferred_element_type=jnp.float32)       # (Bb, 3Hp)
        # 128-aligned whole-vreg gate slices.
        r = jax.nn.sigmoid(gi_s[:, :hp] + gh[:, :hp])
        z = jax.nn.sigmoid(gi_s[:, hp:2 * hp] + gh[:, hp:2 * hp])
        # PyTorch GRU convention: b_hn stays inside r * (...).
        n = jnp.tanh(gi_s[:, 2 * hp:] + r * (gh[:, 2 * hp:] + bhn))
        h = (1.0 - z) * n + z * h
        y_ref[s] = jax.nn.relu(h).astype(y_ref.dtype)                 # lane-dense store
        return h

    h = lax.fori_loop(0, tb, step, h_scratch[...], unroll=min(8, tb))
    h_scratch[...] = h

    @pl.when(t == pl.num_programs(1) - 1)
    def _():
        hid_ref[0] = h.astype(hid_ref.dtype)


def _pick_batch_block(B):
    """Batch tile: full batch if small, else the largest multiple of 8 dividing B."""
    if B <= 8:
        return B
    for bb in range(min(B, 64), 7, -8):
        if B % bb == 0:
            return bb
    return B


def _pick_time_block(T, Bb, Hp, budget_bytes=16 * 1024 * 1024):
    """Largest Tb dividing T whose double-buffered streamed blocks fit the budget.

    Streamed per grid step: gi block (Tb,Bb,3Hp) + y block (Tb,Bb,Hp), f32,
    double-buffered.  Budget is chosen to be comfortably inside v7x's 64 MiB
    VMEM (v5e/v6e have 128 MiB).
    """
    per_t = 2 * Bb * (4 * Hp) * 4
    max_tb = max(1, budget_bytes // max(per_t, 1))
    for tb in range(min(T, max_tb), 0, -1):
        if T % tb == 0:
            return tb
    return 1


@jax.jit
def recovery_net_forward(x, params):
    """x: (B, input_size, time_steps) — same layout as the PyTorch module's input."""
    B, I, T = x.shape
    H = params["whr"].shape[0]
    O = params["wout"].shape[1]
    Hp = _round_up(H, 128)

    Bb = _pick_batch_block(B)
    Tb = _pick_time_block(T, Bb, Hp)

    x_tbi = jnp.transpose(x, (2, 0, 1)).astype(jnp.float32)            # (T, B, I)

    def place_gates(mats, rows):
        """Lay the [r|z|n] gate blocks at 128-aligned lane offsets (zero padding)."""
        out = jnp.zeros((rows, 3 * Hp), jnp.float32)
        for g, m in enumerate(mats):
            out = out.at[:m.shape[0], g * Hp:g * Hp + H].set(m)
        return out

    # Input-side weights/biases; b_hr / b_hz folded in (they sit outside r*(...)).
    wi_pad = place_gates([params["wir"], params["wiz"], params["win"]], I)
    bi_pad = place_gates([params["bir"] + params["bhr"],
                          params["biz"] + params["bhz"],
                          params["bin"]], 1)
    wh_pad = place_gates([params["whr"], params["whz"], params["whn"]], Hp)
    bhn_pad = jnp.zeros((1, Hp), jnp.float32).at[:, :H].set(params["bhn"])

    # Input projection hoisted to XLA: lane-dense streamed operand, full-K GEMM.
    # Padded lanes are zero, so the kernel's padded hidden lanes stay zero.
    gi = jnp.einsum('tbi,ig->tbg', x_tbi, wi_pad) + bi_pad              # (T, B, 3Hp)

    kernel = functools.partial(_gru_chunk_kernel, tb=Tb, hp=Hp)
    const = lambda b, t: (0, 0)

    # NOTE: the resident weight specs (constant index maps) are double-buffered
    # by default; at production H, single-buffer them (pipeline_mode) or DMA
    # once into scratch to halve their VMEM footprint.  Irrelevant at H=32.
    grid_spec = pltpu.PrefetchScalarGridSpec(
        num_scalar_prefetch=0,
        grid=(B // Bb, T // Tb),
        in_specs=[
            pl.BlockSpec((Tb, Bb, 3 * Hp), lambda b, t: (t, b, 0)),    # gi chunk
            pl.BlockSpec((Hp, 3 * Hp), const),                         # wh (resident)
            pl.BlockSpec((1, Hp), const),                              # bh_n (resident)
        ],
        out_specs=[
            pl.BlockSpec((Tb, Bb, Hp), lambda b, t: (t, b, 0)),        # relu(h) chunk
            pl.BlockSpec((1, Bb, Hp), lambda b, t: (0, b, 0)),         # final hidden
        ],
        scratch_shapes=[pltpu.VMEM((Bb, Hp), jnp.float32)],            # hidden state
    )

    relu_h, hid = pl.pallas_call(
        kernel,
        grid_spec=grid_spec,
        out_shape=(
            jax.ShapeDtypeStruct((T, B, Hp), jnp.float32),
            jax.ShapeDtypeStruct((1, B, Hp), jnp.float32),
        ),
        compiler_params=pltpu.CompilerParams(
            # Batch tiles are independent (megacore on v7x); time is sequential.
            dimension_semantics=("parallel", "arbitrary"),
            vmem_limit_bytes=40 * 1024 * 1024,      # safe inside v7x's 64 MiB
        ),
    )(gi, wh_pad, bhn_pad)

    # Tiny (H, O) output Linear + layout change done in XLA (fuses, lane math
    # stays out of the masked-store path the kernel used to pay for).
    y = jnp.einsum('tbh,ho->bto', relu_h[:, :, :H], params["wout"]) + params["bout"]
    hidden = hid[:, :, :H]
    return y, hidden


def init_params(key, input_size, state_size, num_outputs):
    """Deterministic init matching PyTorch GRU/Linear default uniform init."""
    k_gru = 1.0 / math.sqrt(state_size)
    k_lin = 1.0 / math.sqrt(state_size)
    keys = jax.random.split(key, 14)
    u = lambda kk, shape, k: jax.random.uniform(
        kk, shape, dtype=jnp.float32, minval=-k, maxval=k)
    I, H, O = input_size, state_size, num_outputs
    return {
        # stored pre-transposed: x @ W with W of shape (in, out)
        "wir": u(keys[0], (I, H), k_gru),
        "wiz": u(keys[1], (I, H), k_gru),
        "win": u(keys[2], (I, H), k_gru),
        "whr": u(keys[3], (H, H), k_gru),
        "whz": u(keys[4], (H, H), k_gru),
        "whn": u(keys[5], (H, H), k_gru),
        "bir": u(keys[6], (1, H), k_gru),
        "biz": u(keys[7], (1, H), k_gru),
        "bin": u(keys[8], (1, H), k_gru),
        "bhr": u(keys[9], (1, H), k_gru),
        "bhz": u(keys[10], (1, H), k_gru),
        "bhn": u(keys[11], (1, H), k_gru),
        "wout": u(keys[12], (H, O), k_lin),
        "bout": u(keys[13], (1, O), k_lin),
    }


def reference_forward(x, params):
    """Pure-JAX GRU reference (PyTorch semantics) for correctness check."""
    B, I, T = x.shape
    H = params["whr"].shape[0]
    x_bti = jnp.transpose(x, (0, 2, 1)).astype(jnp.float32)   # (B, T, I)

    def step(h, x_t):
        r = jax.nn.sigmoid(x_t @ params["wir"] + params["bir"]
                           + h @ params["whr"] + params["bhr"])
        z = jax.nn.sigmoid(x_t @ params["wiz"] + params["biz"]
                           + h @ params["whz"] + params["bhz"])
        n = jnp.tanh(x_t @ params["win"] + params["bin"]
                     + r * (h @ params["whn"] + params["bhn"]))
        h_new = (1.0 - z) * n + z * h
        return h_new, h_new

    h0 = jnp.zeros((B, H), jnp.float32)
    h_last, outs = lax.scan(step, h0, jnp.transpose(x_bti, (1, 0, 2)))
    rnnout = jnp.transpose(outs, (1, 0, 2))                    # (B, T, H)
    y = jax.nn.relu(rnnout) @ params["wout"] + params["bout"]
    return y, h_last[None]


if __name__ == "__main__":
    # x: (batch, input_size, time_steps)  ->  GRU over time_steps.
    batch, input_size, state_size, num_outputs, time_steps = 2, 4, 32, 3, 8

    key = jax.random.PRNGKey(0)
    pkey, xkey = jax.random.split(key)
    params = init_params(pkey, input_size, state_size, num_outputs)
    x = jax.random.normal(xkey, (batch, input_size, time_steps), dtype=jnp.float32)

    y, hidden = recovery_net_forward(x, params)
    y = jax.block_until_ready(y)
    hidden = jax.block_until_ready(hidden)

    y_ref, hidden_ref = reference_forward(x, params)
    assert y.shape == (batch, time_steps, num_outputs)
    assert hidden.shape == (1, batch, state_size)
    assert jnp.allclose(y, y_ref, atol=1e-5, rtol=1e-5)
    assert jnp.allclose(hidden, hidden_ref, atol=1e-5, rtol=1e-5)

    # TODO(synk): RecoveryNet.update() running mean/variance buffers and the
    # (unused-in-forward) BatchNorm1d are training-time statistics, not part
    # of this forward kernel.
    print("KERNEL_OK")
</pallas_src>

<mosaic_0001>
module attributes {stable_mosaic.version = 11 : i64} {
  func.func @_gru_chunk_kernel(%arg0: i32, %arg1: i32, %arg2: memref<8x2x384xf32, #tpu.memory_space<vmem>>, %arg3: memref<128x384xf32, #tpu.memory_space<vmem>>, %arg4: memref<1x128xf32, #tpu.memory_space<vmem>>, %arg5: memref<8x2x128xf32, #tpu.memory_space<vmem>>, %arg6: memref<1x2x128xf32, #tpu.memory_space<vmem>>, %arg7: memref<2x128xf32, #tpu.memory_space<vmem>>) attributes {dimension_semantics = [#tpu.dimension_semantics<parallel>, #tpu.dimension_semantics<arbitrary>], iteration_bounds = array<i64: 1, 1>, scalar_prefetch = 0 : i64, scratch_operands = 1 : i64, tpu.core_type = #tpu.core_type<tc>, window_params = [{transform_indices = @transform_0, window_bounds = array<i64: 8, 2, 384>}, {pipeline_mode = #tpu.pipeline_mode<synchronous>, transform_indices = @transform_1, window_bounds = array<i64: 128, 384>}, {pipeline_mode = #tpu.pipeline_mode<synchronous>, transform_indices = @transform_2, window_bounds = array<i64: 1, 128>}, {transform_indices = @transform_3, window_bounds = array<i64: 8, 2, 128>}, {transform_indices = @transform_4, window_bounds = array<i64: 1, 2, 128>}]} {
    %c0_i32 = arith.constant 0 : i32
    %0 = arith.cmpi eq, %arg1, %c0_i32 : i32
    %1 = arith.extui %0 : i1 to i32
    %c0_i32_0 = arith.constant 0 : i32
    %2 = arith.cmpi ne, %1, %c0_i32_0 : i32
    scf.if %2 {
      %cst_82 = arith.constant 0.000000e+00 : f32
      %314 = vector.broadcast %cst_82 : f32 to vector<2x128xf32>
      %c0_83 = arith.constant 0 : index
      %c0_84 = arith.constant 0 : index
      %315 = vector.load %arg7[%c0_83, %c0_84] : memref<2x128xf32, #tpu.memory_space<vmem>>, vector<2x128xf32>
      tpu.vector_store %arg7[%c0_83, %c0_84], %314 {strides = array<i32>} : memref<2x128xf32, #tpu.memory_space<vmem>>, vector<2x128xf32>,
    } else {
    }
    %c0 = arith.constant 0 : index
    %c0_1 = arith.constant 0 : index
    %3 = vector.load %arg3[%c0, %c0_1] : memref<128x384xf32, #tpu.memory_space<vmem>>, vector<128x384xf32>
    %c0_2 = arith.constant 0 : index
    %c0_3 = arith.constant 0 : index
    %4 = vector.load %arg4[%c0_2, %c0_3] : memref<1x128xf32, #tpu.memory_space<vmem>>, vector<1x128xf32>
    %c0_4 = arith.constant 0 : index
    %c0_5 = arith.constant 0 : index
    %5 = vector.load %arg7[%c0_4, %c0_5] : memref<2x128xf32, #tpu.memory_space<vmem>>, vector<2x128xf32>
    %c0_i32_6 = arith.constant 0 : i32
    %6 = arith.index_cast %c0_i32_6 : i32 to index
    %c0_7 = arith.constant 0 : index
    %c0_8 = arith.constant 0 : index
    %7 = vector.load %arg2[%6, %c0_7, %c0_8] : memref<8x2x384xf32, #tpu.memory_space<vmem>>, vector<1x2x384xf32>
    %8 = vector.shape_cast %7 : vector<1x2x384xf32> to vector<2x384xf32>
    %cst = arith.constant dense<0.000000e+00> : vector<2x384xf32>
    %9 = tpu.matmul %5, %3, %cst {dimension_numbers = #tpu.dot_dimension_numbers<[1], [0], [0], [1], [0, 0, 1, 1], [], []>} : vector<2x128xf32>, vector<128x384xf32>, vector<2x384xf32> -> vector<2x384xf32>
    %10 = vector.extract_strided_slice %8 {offsets = [0, 0], sizes = [2, 128], strides = [1, 1]} : vector<2x384xf32> to vector<2x128xf32>
    %11 = vector.extract_strided_slice %9 {offsets = [0, 0], sizes = [2, 128], strides = [1, 1]} : vector<2x384xf32> to vector<2x128xf32>
    %12 = arith.addf %10, %11 : vector<2x128xf32>
    %13 = arith.negf %12 : vector<2x128xf32>
    %14 = math.exp %13 : vector<2x128xf32>
    %cst_9 = arith.constant 1.000000e+00 : f32
    %15 = vector.broadcast %cst_9 : f32 to vector<2x128xf32>
    %16 = arith.addf %15, %14 : vector<2x128xf32>
    %17 = arith.divf %15, %16 : vector<2x128xf32>
    %18 = vector.extract_strided_slice %8 {offsets = [0, 128], sizes = [2, 128], strides = [1, 1]} : vector<2x384xf32> to vector<2x128xf32>
    %19 = vector.extract_strided_slice %9 {offsets = [0, 128], sizes = [2, 128], strides = [1, 1]} : vector<2x384xf32> to vector<2x128xf32>
    %20 = arith.addf %18, %19 : vector<2x128xf32>
    %21 = arith.negf %20 : vector<2x128xf32>
    %22 = math.exp %21 : vector<2x128xf32>
    %cst_10 = arith.constant 1.000000e+00 : f32
    %23 = vector.broadcast %cst_10 : f32 to vector<2x128xf32>
    %24 = arith.addf %23, %22 : vector<2x128xf32>
    %25 = arith.divf %23, %24 : vector<2x128xf32>
    %26 = vector.extract_strided_slice %8 {offsets = [0, 256], sizes = [2, 128], strides = [1, 1]} : vector<2x384xf32> to vector<2x128xf32>
    %27 = vector.extract_strided_slice %9 {offsets = [0, 256], sizes = [2, 128], strides = [1, 1]} : vector<2x384xf32> to vector<2x128xf32>
    %28 = vector.broadcast %4 : vector<1x128xf32> to vector<2x128xf32>
    %29 = arith.addf %27, %28 : vector<2x128xf32>
    %30 = arith.mulf %17, %29 : vector<2x128xf32>
    %31 = arith.addf %26, %30 : vector<2x128xf32>
    %32 = math.tanh %31 : vector<2x128xf32>
    %cst_11 = arith.constant 1.000000e+00 : f32
    %33 = vector.broadcast %cst_11 : f32 to vector<2x128xf32>
    %34 = arith.subf %33, %25 : vector<2x128xf32>
    %35 = arith.mulf %34, %32 : vector<2x128xf32>
    %36 = arith.mulf %25, %5 : vector<2x128xf32>
    %37 = arith.addf %35, %36 : vector<2x128xf32>
    %cst_12 = arith.constant 0.000000e+00 : f32
    %38 = vector.broadcast %cst_12 : f32 to vector<2x128xf32>
    %39 = arith.maximumf %37, %38 : vector<2x128xf32>
    %40 = arith.index_cast %c0_i32_6 : i32 to index
    %c0_13 = arith.constant 0 : index
    %c0_14 = arith.constant 0 : index
    %41 = vector.load %arg5[%40, %c0_13, %c0_14] : memref<8x2x128xf32, #tpu.memory_space<vmem>>, vector<1x2x128xf32>
    %42 = vector.shape_cast %41 : vector<1x2x128xf32> to vector<2x128xf32>
    %43 = vector.shape_cast %39 : vector<2x128xf32> to vector<1x2x128xf32>
    tpu.vector_store %arg5[%40, %c0_13, %c0_14], %43 {strides = array<i32>} : memref<8x2x128xf32, #tpu.memory_space<vmem>>, vector<1x2x128xf32>,
    %c1_i32 = arith.constant 1 : i32
    %44 = arith.index_cast %c1_i32 : i32 to index
    %c0_15 = arith.constant 0 : index
    %c0_16 = arith.constant 0 : index
    %45 = vector.load %arg2[%44, %c0_15, %c0_16] : memref<8x2x384xf32, #tpu.memory_space<vmem>>, vector<1x2x384xf32>
    %46 = vector.shape_cast %45 : vector<1x2x384xf32> to vector<2x384xf32>
    %cst_17 = arith.constant dense<0.000000e+00> : vector<2x384xf32>
    %47 = tpu.matmul %37, %3, %cst_17 {dimension_numbers = #tpu.dot_dimension_numbers<[1], [0], [0], [1], [0, 0, 1, 1], [], []>} : vector<2x128xf32>, vector<128x384xf32>, vector<2x384xf32> -> vector<2x384xf32>
    %48 = vector.extract_strided_slice %46 {offsets = [0, 0], sizes = [2, 128], strides = [1, 1]} : vector<2x384xf32> to vector<2x128xf32>
    %49 = vector.extract_strided_slice %47 {offsets = [0, 0], sizes = [2, 128], strides = [1, 1]} : vector<2x384xf32> to vector<2x128xf32>
    %50 = arith.addf %48, %49 : vector<2x128xf32>
    %51 = arith.negf %50 : vector<2x128xf32>
    %52 = math.exp %51 : vector<2x128xf32>
    %cst_18 = arith.constant 1.000000e+00 : f32
    %53 = vector.broadcast %cst_18 : f32 to vector<2x128xf32>
    %54 = arith.addf %53, %52 : vector<2x128xf32>
    %55 = arith.divf %53, %54 : vector<2x128xf32>
    %56 = vector.extract_strided_slice %46 {offsets = [0, 128], sizes = [2, 128], strides = [1, 1]} : vector<2x384xf32> to vector<2x128xf32>
    %57 = vector.extract_strided_slice %47 {offsets = [0, 128], sizes = [2, 128], strides = [1, 1]} : vector<2x384xf32> to vector<2x128xf32>
    %58 = arith.addf %56, %57 : vector<2x128xf32>
    %59 = arith.negf %58 : vector<2x128xf32>
    %60 = math.exp %59 : vector<2x128xf32>
    %cst_19 = arith.constant 1.000000e+00 : f32
    %61 = vector.broadcast %cst_19 : f32 to vector<2x128xf32>
    %62 = arith.addf %61, %60 : vector<2x128xf32>
    %63 = arith.divf %61, %62 : vector<2x128xf32>
    %64 = vector.extract_strided_slice %46 {offsets = [0, 256], sizes = [2, 128], strides = [1, 1]} : vector<2x384xf32> to vector<2x128xf32>
    %65 = vector.extract_strided_slice %47 {offsets = [0, 256], sizes = [2, 128], strides = [1, 1]} : vector<2x384xf32> to vector<2x128xf32>
    %66 = vector.broadcast %4 : vector<1x128xf32> to vector<2x128xf32>
    %67 = arith.addf %65, %66 : vector<2x128xf32>
    %68 = arith.mulf %55, %67 : vector<2x128xf32>
    %69 = arith.addf %64, %68 : vector<2x128xf32>
    %70 = math.tanh %69 : vector<2x128xf32>
    %cst_20 = arith.constant 1.000000e+00 : f32
    %71 = vector.broadcast %cst_20 : f32 to vector<2x128xf32>
    %72 = arith.subf %71, %63 : vector<2x128xf32>
    %73 = arith.mulf %72, %70 : vector<2x128xf32>
    %74 = arith.mulf %63, %37 : vector<2x128xf32>
    %75 = arith.addf %73, %74 : vector<2x128xf32>
    %cst_21 = arith.constant 0.000000e+00 : f32
    %76 = vector.broadcast %cst_21 : f32 to vector<2x128xf32>
    %77 = arith.maximumf %75, %76 : vector<2x128xf32>
    %78 = arith.index_cast %c1_i32 : i32 to index
    %c0_22 = arith.constant 0 : index
    %c0_23 = arith.constant 0 : index
    %79 = vector.load %arg5[%78, %c0_22, %c0_23] : memref<8x2x128xf32, #tpu.memory_space<vmem>>, vector<1x2x128xf32>
    %80 = vector.shape_cast %79 : vector<1x2x128xf32> to vector<2x128xf32>
    %81 = vector.shape_cast %77 : vector<2x128xf32> to vector<1x2x128xf32>
    tpu.vector_store %arg5[%78, %c0_22, %c0_23], %81 {strides = array<i32>} : memref<8x2x128xf32, #tpu.memory_space<vmem>>, vector<1x2x128xf32>,
    %c2_i32 = arith.constant 2 : i32
    %82 = arith.index_cast %c2_i32 : i32 to index
    %c0_24 = arith.constant 0 : index
    %c0_25 = arith.constant 0 : index
    %83 = vector.load %arg2[%82, %c0_24, %c0_25] : memref<8x2x384xf32, #tpu.memory_space<vmem>>, vector<1x2x384xf32>
    %84 = vector.shape_cast %83 : vector<1x2x384xf32> to vector<2x384xf32>
    %cst_26 = arith.constant dense<0.000000e+00> : vector<2x384xf32>
    %85 = tpu.matmul %75, %3, %cst_26 {dimension_numbers = #tpu.dot_dimension_numbers<[1], [0], [0], [1], [0, 0, 1, 1], [], []>} : vector<2x128xf32>, vector<128x384xf32>, vector<2x384xf32> -> vector<2x384xf32>
    %86 = vector.extract_strided_slice %84 {offsets = [0, 0], sizes = [2, 128], strides = [1, 1]} : vector<2x384xf32> to vector<2x128xf32>
    %87 = vector.extract_strided_slice %85 {offsets = [0, 0], sizes = [2, 128], strides = [1, 1]} : vector<2x384xf32> to vector<2x128xf32>
    %88 = arith.addf %86, %87 : vector<2x128xf32>
    %89 = arith.negf %88 : vector<2x128xf32>
    %90 = math.exp %89 : vector<2x128xf32>
    %cst_27 = arith.constant 1.000000e+00 : f32
    %91 = vector.broadcast %cst_27 : f32 to vector<2x128xf32>
    %92 = arith.addf %91, %90 : vector<2x128xf32>
    %93 = arith.divf %91, %92 : vector<2x128xf32>
    %94 = vector.extract_strided_slice %84 {offsets = [0, 128], sizes = [2, 128], strides = [1, 1]} : vector<2x384xf32> to vector<2x128xf32>
    %95 = vector.extract_strided_slice %85 {offsets = [0, 128], sizes = [2, 128], strides = [1, 1]} : vector<2x384xf32> to vector<2x128xf32>
    %96 = arith.addf %94, %95 : vector<2x128xf32>
    %97 = arith.negf %96 : vector<2x128xf32>
    %98 = math.exp %97 : vector<2x128xf32>
    %cst_28 = arith.constant 1.000000e+00 : f32
    %99 = vector.broadcast %cst_28 : f32 to vector<2x128xf32>
    %100 = arith.addf %99, %98 : vector<2x128xf32>
    %101 = arith.divf %99, %100 : vector<2x128xf32>
    %102 = vector.extract_strided_slice %84 {offsets = [0, 256], sizes = [2, 128], strides = [1, 1]} : vector<2x384xf32> to vector<2x128xf32>
    %103 = vector.extract_strided_slice %85 {offsets = [0, 256], sizes = [2, 128], strides = [1, 1]} : vector<2x384xf32> to vector<2x128xf32>
    %104 = vector.broadcast %4 : vector<1x128xf32> to vector<2x128xf32>
    %105 = arith.addf %103, %104 : vector<2x128xf32>
    %106 = arith.mulf %93, %105 : vector<2x128xf32>
    %107 = arith.addf %102, %106 : vector<2x128xf32>
    %108 = math.tanh %107 : vector<2x128xf32>
    %cst_29 = arith.constant 1.000000e+00 : f32
    %109 = vector.broadcast %cst_29 : f32 to vector<2x128xf32>
    %110 = arith.subf %109, %101 : vector<2x128xf32>
    %111 = arith.mulf %110, %108 : vector<2x128xf32>
    %112 = arith.mulf %101, %75 : vector<2x128xf32>
    %113 = arith.addf %111, %112 : vector<2x128xf32>
    %cst_30 = arith.constant 0.000000e+00 : f32
    %114 = vector.broadcast %cst_30 : f32 to vector<2x128xf32>
    %115 = arith.maximumf %113, %114 : vector<2x128xf32>
    %116 = arith.index_cast %c2_i32 : i32 to index
    %c0_31 = arith.constant 0 : index
    %c0_32 = arith.constant 0 : index
    %117 = vector.load %arg5[%116, %c0_31, %c0_32] : memref<8x2x128xf32, #tpu.memory_space<vmem>>, vector<1x2x128xf32>
    %118 = vector.shape_cast %117 : vector<1x2x128xf32> to vector<2x128xf32>
    %119 = vector.shape_cast %115 : vector<2x128xf32> to vector<1x2x128xf32>
    tpu.vector_store %arg5[%116, %c0_31, %c0_32], %119 {strides = array<i32>} : memref<8x2x128xf32, #tpu.memory_space<vmem>>, vector<1x2x128xf32>,
    %c3_i32 = arith.constant 3 : i32
    %120 = arith.index_cast %c3_i32 : i32 to index
    %c0_33 = arith.constant 0 : index
    %c0_34 = arith.constant 0 : index
    %121 = vector.load %arg2[%120, %c0_33, %c0_34] : memref<8x2x384xf32, #tpu.memory_space<vmem>>, vector<1x2x384xf32>
    %122 = vector.shape_cast %121 : vector<1x2x384xf32> to vector<2x384xf32>
    %cst_35 = arith.constant dense<0.000000e+00> : vector<2x384xf32>
    %123 = tpu.matmul %113, %3, %cst_35 {dimension_numbers = #tpu.dot_dimension_numbers<[1], [0], [0], [1], [0, 0, 1, 1], [], []>} : vector<2x128xf32>, vector<128x384xf32>, vector<2x384xf32> -> vector<2x384xf32>
    %124 = vector.extract_strided_slice %122 {offsets = [0, 0], sizes = [2, 128], strides = [1, 1]} : vector<2x384xf32> to vector<2x128xf32>
    %125 = vector.extract_strided_slice %123 {offsets = [0, 0], sizes = [2, 128], strides = [1, 1]} : vector<2x384xf32> to vector<2x128xf32>
    %126 = arith.addf %124, %125 : vector<2x128xf32>
    %127 = arith.negf %126 : vector<2x128xf32>
    %128 = math.exp %127 : vector<2x128xf32>
    %cst_36 = arith.constant 1.000000e+00 : f32
    %129 = vector.broadcast %cst_36 : f32 to vector<2x128xf32>
    %130 = arith.addf %129, %128 : vector<2x128xf32>
    %131 = arith.divf %129, %130 : vector<2x128xf32>
    %132 = vector.extract_strided_slice %122 {offsets = [0, 128], sizes = [2, 128], strides = [1, 1]} : vector<2x384xf32> to vector<2x128xf32>
    %133 = vector.extract_strided_slice %123 {offsets = [0, 128], sizes = [2, 128], strides = [1, 1]} : vector<2x384xf32> to vector<2x128xf32>
    %134 = arith.addf %132, %133 : vector<2x128xf32>
    %135 = arith.negf %134 : vector<2x128xf32>
    %136 = math.exp %135 : vector<2x128xf32>
    %cst_37 = arith.constant 1.000000e+00 : f32
    %137 = vector.broadcast %cst_37 : f32 to vector<2x128xf32>
    %138 = arith.addf %137, %136 : vector<2x128xf32>
    %139 = arith.divf %137, %138 : vector<2x128xf32>
    %140 = vector.extract_strided_slice %122 {offsets = [0, 256], sizes = [2, 128], strides = [1, 1]} : vector<2x384xf32> to vector<2x128xf32>
    %141 = vector.extract_strided_slice %123 {offsets = [0, 256], sizes = [2, 128], strides = [1, 1]} : vector<2x384xf32> to vector<2x128xf32>
    %142 = vector.broadcast %4 : vector<1x128xf32> to vector<2x128xf32>
    %143 = arith.addf %141, %142 : vector<2x128xf32>
    %144 = arith.mulf %131, %143 : vector<2x128xf32>
    %145 = arith.addf %140, %144 : vector<2x128xf32>
    %146 = math.tanh %145 : vector<2x128xf32>
    %cst_38 = arith.constant 1.000000e+00 : f32
    %147 = vector.broadcast %cst_38 : f32 to vector<2x128xf32>
    %148 = arith.subf %147, %139 : vector<2x128xf32>
    %149 = arith.mulf %148, %146 : vector<2x128xf32>
    %150 = arith.mulf %139, %113 : vector<2x128xf32>
    %151 = arith.addf %149, %150 : vector<2x128xf32>
    %cst_39 = arith.constant 0.000000e+00 : f32
    %152 = vector.broadcast %cst_39 : f32 to vector<2x128xf32>
    %153 = arith.maximumf %151, %152 : vector<2x128xf32>
    %154 = arith.index_cast %c3_i32 : i32 to index
    %c0_40 = arith.constant 0 : index
    %c0_41 = arith.constant 0 : index
    %155 = vector.load %arg5[%154, %c0_40, %c0_41] : memref<8x2x128xf32, #tpu.memory_space<vmem>>, vector<1x2x128xf32>
    %156 = vector.shape_cast %155 : vector<1x2x128xf32> to vector<2x128xf32>
    %157 = vector.shape_cast %153 : vector<2x128xf32> to vector<1x2x128xf32>
    tpu.vector_store %arg5[%154, %c0_40, %c0_41], %157 {strides = array<i32>} : memref<8x2x128xf32, #tpu.memory_space<vmem>>, vector<1x2x128xf32>,
    %c4_i32 = arith.constant 4 : i32
    %158 = arith.index_cast %c4_i32 : i32 to index
    %c0_42 = arith.constant 0 : index
    %c0_43 = arith.constant 0 : index
    %159 = vector.load %arg2[%158, %c0_42, %c0_43] : memref<8x2x384xf32, #tpu.memory_space<vmem>>, vector<1x2x384xf32>
    %160 = vector.shape_cast %159 : vector<1x2x384xf32> to vector<2x384xf32>
    %cst_44 = arith.constant dense<0.000000e+00> : vector<2x384xf32>
    %161 = tpu.matmul %151, %3, %cst_44 {dimension_numbers = #tpu.dot_dimension_numbers<[1], [0], [0], [1], [0, 0, 1, 1], [], []>} : vector<2x128xf32>, vector<128x384xf32>, vector<2x384xf32> -> vector<2x384xf32>
    %162 = vector.extract_strided_slice %160 {offsets = [0, 0], sizes = [2, 128], strides = [1, 1]} : vector<2x384xf32> to vector<2x128xf32>
    %163 = vector.extract_strided_slice %161 {offsets = [0, 0], sizes = [2, 128], strides = [1, 1]} : vector<2x384xf32> to vector<2x128xf32>
    %164 = arith.addf %162, %163 : vector<2x128xf32>
    %165 = arith.negf %164 : vector<2x128xf32>
    %166 = math.exp %165 : vector<2x128xf32>
    %cst_45 = arith.constant 1.000000e+00 : f32
    %167 = vector.broadcast %cst_45 : f32 to vector<2x128xf32>
    %168 = arith.addf %167, %166 : vector<2x128xf32>
    %169 = arith.divf %167, %168 : vector<2x128xf32>
    %170 = vector.extract_strided_slice %160 {offsets = [0, 128], sizes = [2, 128], strides = [1, 1]} : vector<2x384xf32> to vector<2x128xf32>
    %171 = vector.extract_strided_slice %161 {offsets = [0, 128], sizes = [2, 128], strides = [1, 1]} : vector<2x384xf32> to vector<2x128xf32>
    %172 = arith.addf %170, %171 : vector<2x128xf32>
    %173 = arith.negf %172 : vector<2x128xf32>
    %174 = math.exp %173 : vector<2x128xf32>
    %cst_46 = arith.constant 1.000000e+00 : f32
    %175 = vector.broadcast %cst_46 : f32 to vector<2x128xf32>
    %176 = arith.addf %175, %174 : vector<2x128xf32>
    %177 = arith.divf %175, %176 : vector<2x128xf32>
    %178 = vector.extract_strided_slice %160 {offsets = [0, 256], sizes = [2, 128], strides = [1, 1]} : vector<2x384xf32> to vector<2x128xf32>
    %179 = vector.extract_strided_slice %161 {offsets = [0, 256], sizes = [2, 128], strides = [1, 1]} : vector<2x384xf32> to vector<2x128xf32>
    %180 = vector.broadcast %4 : vector<1x128xf32> to vector<2x128xf32>
    %181 = arith.addf %179, %180 : vector<2x128xf32>
    %182 = arith.mulf %169, %181 : vector<2x128xf32>
    %183 = arith.addf %178, %182 : vector<2x128xf32>
    %184 = math.tanh %183 : vector<2x128xf32>
    %cst_47 = arith.constant 1.000000e+00 : f32
    %185 = vector.broadcast %cst_47 : f32 to vector<2x128xf32>
    %186 = arith.subf %185, %177 : vector<2x128xf32>
    %187 = arith.mulf %186, %184 : vector<2x128xf32>
    %188 = arith.mulf %177, %151 : vector<2x128xf32>
    %189 = arith.addf %187, %188 : vector<2x128xf32>
    %cst_48 = arith.constant 0.000000e+00 : f32
    %190 = vector.broadcast %cst_48 : f32 to vector<2x128xf32>
    %191 = arith.maximumf %189, %190 : vector<2x128xf32>
    %192 = arith.index_cast %c4_i32 : i32 to index
    %c0_49 = arith.constant 0 : index
    %c0_50 = arith.constant 0 : index
    %193 = vector.load %arg5[%192, %c0_49, %c0_50] : memref<8x2x128xf32, #tpu.memory_space<vmem>>, vector<1x2x128xf32>
    %194 = vector.shape_cast %193 : vector<1x2x128xf32> to vector<2x128xf32>
    %195 = vector.shape_cast %191 : vector<2x128xf32> to vector<1x2x128xf32>
    tpu.vector_store %arg5[%192, %c0_49, %c0_50], %195 {strides = array<i32>} : memref<8x2x128xf32, #tpu.memory_space<vmem>>, vector<1x2x128xf32>,
    %c5_i32 = arith.constant 5 : i32
    %196 = arith.index_cast %c5_i32 : i32 to index
    %c0_51 = arith.constant 0 : index
    %c0_52 = arith.constant 0 : index
    %197 = vector.load %arg2[%196, %c0_51, %c0_52] : memref<8x2x384xf32, #tpu.memory_space<vmem>>, vector<1x2x384xf32>
    %198 = vector.shape_cast %197 : vector<1x2x384xf32> to vector<2x384xf32>
    %cst_53 = arith.constant dense<0.000000e+00> : vector<2x384xf32>
    %199 = tpu.matmul %189, %3, %cst_53 {dimension_numbers = #tpu.dot_dimension_numbers<[1], [0], [0], [1], [0, 0, 1, 1], [], []>} : vector<2x128xf32>, vector<128x384xf32>, vector<2x384xf32> -> vector<2x384xf32>
    %200 = vector.extract_strided_slice %198 {offsets = [0, 0], sizes = [2, 128], strides = [1, 1]} : vector<2x384xf32> to vector<2x128xf32>
    %201 = vector.extract_strided_slice %199 {offsets = [0, 0], sizes = [2, 128], strides = [1, 1]} : vector<2x384xf32> to vector<2x128xf32>
    %202 = arith.addf %200, %201 : vector<2x128xf32>
    %203 = arith.negf %202 : vector<2x128xf32>
    %204 = math.exp %203 : vector<2x128xf32>
    %cst_54 = arith.constant 1.000000e+00 : f32
    %205 = vector.broadcast %cst_54 : f32 to vector<2x128xf32>
    %206 = arith.addf %205, %204 : vector<2x128xf32>
    %207 = arith.divf %205, %206 : vector<2x128xf32>
    %208 = vector.extract_strided_slice %198 {offsets = [0, 128], sizes = [2, 128], strides = [1, 1]} : vector<2x384xf32> to vector<2x128xf32>
    %209 = vector.extract_strided_slice %199 {offsets = [0, 128], sizes = [2, 128], strides = [1, 1]} : vector<2x384xf32> to vector<2x128xf32>
    %210 = arith.addf %208, %209 : vector<2x128xf32>
    %211 = arith.negf %210 : vector<2x128xf32>
    %212 = math.exp %211 : vector<2x128xf32>
    %cst_55 = arith.constant 1.000000e+00 : f32
    %213 = vector.broadcast %cst_55 : f32 to vector<2x128xf32>
    %214 = arith.addf %213, %212 : vector<2x128xf32>
    %215 = arith.divf %213, %214 : vector<2x128xf32>
    %216 = vector.extract_strided_slice %198 {offsets = [0, 256], sizes = [2, 128], strides = [1, 1]} : vector<2x384xf32> to vector<2x128xf32>
    %217 = vector.extract_strided_slice %199 {offsets = [0, 256], sizes = [2, 128], strides = [1, 1]} : vector<2x384xf32> to vector<2x128xf32>
    %218 = vector.broadcast %4 : vector<1x128xf32> to vector<2x128xf32>
    %219 = arith.addf %217, %218 : vector<2x128xf32>
    %220 = arith.mulf %207, %219 : vector<2x128xf32>
    %221 = arith.addf %216, %220 : vector<2x128xf32>
    %222 = math.tanh %221 : vector<2x128xf32>
    %cst_56 = arith.constant 1.000000e+00 : f32
    %223 = vector.broadcast %cst_56 : f32 to vector<2x128xf32>
    %224 = arith.subf %223, %215 : vector<2x128xf32>
    %225 = arith.mulf %224, %222 : vector<2x128xf32>
    %226 = arith.mulf %215, %189 : vector<2x128xf32>
    %227 = arith.addf %225, %226 : vector<2x128xf32>
    %cst_57 = arith.constant 0.000000e+00 : f32
    %228 = vector.broadcast %cst_57 : f32 to vector<2x128xf32>
    %229 = arith.maximumf %227, %228 : vector<2x128xf32>
    %230 = arith.index_cast %c5_i32 : i32 to index
    %c0_58 = arith.constant 0 : index
    %c0_59 = arith.constant 0 : index
    %231 = vector.load %arg5[%230, %c0_58, %c0_59] : memref<8x2x128xf32, #tpu.memory_space<vmem>>, vector<1x2x128xf32>
    %232 = vector.shape_cast %231 : vector<1x2x128xf32> to vector<2x128xf32>
    %233 = vector.shape_cast %229 : vector<2x128xf32> to vector<1x2x128xf32>
    tpu.vector_store %arg5[%230, %c0_58, %c0_59], %233 {strides = array<i32>} : memref<8x2x128xf32, #tpu.memory_space<vmem>>, vector<1x2x128xf32>,
    %c6_i32 = arith.constant 6 : i32
    %234 = arith.index_cast %c6_i32 : i32 to index
    %c0_60 = arith.constant 0 : index
    %c0_61 = arith.constant 0 : index
    %235 = vector.load %arg2[%234, %c0_60, %c0_61] : memref<8x2x384xf32, #tpu.memory_space<vmem>>, vector<1x2x384xf32>
    %236 = vector.shape_cast %235 : vector<1x2x384xf32> to vector<2x384xf32>
    %cst_62 = arith.constant dense<0.000000e+00> : vector<2x384xf32>
    %237 = tpu.matmul %227, %3, %cst_62 {dimension_numbers = #tpu.dot_dimension_numbers<[1], [0], [0], [1], [0, 0, 1, 1], [], []>} : vector<2x128xf32>, vector<128x384xf32>, vector<2x384xf32> -> vector<2x384xf32>
    %238 = vector.extract_strided_slice %236 {offsets = [0, 0], sizes = [2, 128], strides = [1, 1]} : vector<2x384xf32> to vector<2x128xf32>
    %239 = vector.extract_strided_slice %237 {offsets = [0, 0], sizes = [2, 128], strides = [1, 1]} : vector<2x384xf32> to vector<2x128xf32>
    %240 = arith.addf %238, %239 : vector<2x128xf32>
    %241 = arith.negf %240 : vector<2x128xf32>
    %242 = math.exp %241 : vector<2x128xf32>
    %cst_63 = arith.constant 1.000000e+00 : f32
    %243 = vector.broadcast %cst_63 : f32 to vector<2x128xf32>
    %244 = arith.addf %243, %242 : vector<2x128xf32>
    %245 = arith.divf %243, %244 : vector<2x128xf32>
    %246 = vector.extract_strided_slice %236 {offsets = [0, 128], sizes = [2, 128], strides = [1, 1]} : vector<2x384xf32> to vector<2x128xf32>
    %247 = vector.extract_strided_slice %237 {offsets = [0, 128], sizes = [2, 128], strides = [1, 1]} : vector<2x384xf32> to vector<2x128xf32>
    %248 = arith.addf %246, %247 : vector<2x128xf32>
    %249 = arith.negf %248 : vector<2x128xf32>
    %250 = math.exp %249 : vector<2x128xf32>
    %cst_64 = arith.constant 1.000000e+00 : f32
    %251 = vector.broadcast %cst_64 : f32 to vector<2x128xf32>
    %252 = arith.addf %251, %250 : vector<2x128xf32>
    %253 = arith.divf %251, %252 : vector<2x128xf32>
    %254 = vector.extract_strided_slice %236 {offsets = [0, 256], sizes = [2, 128], strides = [1, 1]} : vector<2x384xf32> to vector<2x128xf32>
    %255 = vector.extract_strided_slice %237 {offsets = [0, 256], sizes = [2, 128], strides = [1, 1]} : vector<2x384xf32> to vector<2x128xf32>
    %256 = vector.broadcast %4 : vector<1x128xf32> to vector<2x128xf32>
    %257 = arith.addf %255, %256 : vector<2x128xf32>
    %258 = arith.mulf %245, %257 : vector<2x128xf32>
    %259 = arith.addf %254, %258 : vector<2x128xf32>
    %260 = math.tanh %259 : vector<2x128xf32>
    %cst_65 = arith.constant 1.000000e+00 : f32
    %261 = vector.broadcast %cst_65 : f32 to vector<2x128xf32>
    %262 = arith.subf %261, %253 : vector<2x128xf32>
    %263 = arith.mulf %262, %260 : vector<2x128xf32>
    %264 = arith.mulf %253, %227 : vector<2x128xf32>
    %265 = arith.addf %263, %264 : vector<2x128xf32>
    %cst_66 = arith.constant 0.000000e+00 : f32
    %266 = vector.broadcast %cst_66 : f32 to vector<2x128xf32>
    %267 = arith.maximumf %265, %266 : vector<2x128xf32>
    %268 = arith.index_cast %c6_i32 : i32 to index
    %c0_67 = arith.constant 0 : index
    %c0_68 = arith.constant 0 : index
    %269 = vector.load %arg5[%268, %c0_67, %c0_68] : memref<8x2x128xf32, #tpu.memory_space<vmem>>, vector<1x2x128xf32>
    %270 = vector.shape_cast %269 : vector<1x2x128xf32> to vector<2x128xf32>
    %271 = vector.shape_cast %267 : vector<2x128xf32> to vector<1x2x128xf32>
    tpu.vector_store %arg5[%268, %c0_67, %c0_68], %271 {strides = array<i32>} : memref<8x2x128xf32, #tpu.memory_space<vmem>>, vector<1x2x128xf32>,
    %c7_i32 = arith.constant 7 : i32
    %272 = arith.index_cast %c7_i32 : i32 to index
    %c0_69 = arith.constant 0 : index
    %c0_70 = arith.constant 0 : index
    %273 = vector.load %arg2[%272, %c0_69, %c0_70] : memref<8x2x384xf32, #tpu.memory_space<vmem>>, vector<1x2x384xf32>
    %274 = vector.shape_cast %273 : vector<1x2x384xf32> to vector<2x384xf32>
    %cst_71 = arith.constant dense<0.000000e+00> : vector<2x384xf32>
    %275 = tpu.matmul %265, %3, %cst_71 {dimension_numbers = #tpu.dot_dimension_numbers<[1], [0], [0], [1], [0, 0, 1, 1], [], []>} : vector<2x128xf32>, vector<128x384xf32>, vector<2x384xf32> -> vector<2x384xf32>
    %276 = vector.extract_strided_slice %274 {offsets = [0, 0], sizes = [2, 128], strides = [1, 1]} : vector<2x384xf32> to vector<2x128xf32>
    %277 = vector.extract_strided_slice %275 {offsets = [0, 0], sizes = [2, 128], strides = [1, 1]} : vector<2x384xf32> to vector<2x128xf32>
    %278 = arith.addf %276, %277 : vector<2x128xf32>
    %279 = arith.negf %278 : vector<2x128xf32>
    %280 = math.exp %279 : vector<2x128xf32>
    %cst_72 = arith.constant 1.000000e+00 : f32
    %281 = vector.broadcast %cst_72 : f32 to vector<2x128xf32>
    %282 = arith.addf %281, %280 : vector<2x128xf32>
    %283 = arith.divf %281, %282 : vector<2x128xf32>
    %284 = vector.extract_strided_slice %274 {offsets = [0, 128], sizes = [2, 128], strides = [1, 1]} : vector<2x384xf32> to vector<2x128xf32>
    %285 = vector.extract_strided_slice %275 {offsets = [0, 128], sizes = [2, 128], strides = [1, 1]} : vector<2x384xf32> to vector<2x128xf32>
    %286 = arith.addf %284, %285 : vector<2x128xf32>
    %287 = arith.negf %286 : vector<2x128xf32>
    %288 = math.exp %287 : vector<2x128xf32>
    %cst_73 = arith.constant 1.000000e+00 : f32
    %289 = vector.broadcast %cst_73 : f32 to vector<2x128xf32>
    %290 = arith.addf %289, %288 : vector<2x128xf32>
    %291 = arith.divf %289, %290 : vector<2x128xf32>
    %292 = vector.extract_strided_slice %274 {offsets = [0, 256], sizes = [2, 128], strides = [1, 1]} : vector<2x384xf32> to vector<2x128xf32>
    %293 = vector.extract_strided_slice %275 {offsets = [0, 256], sizes = [2, 128], strides = [1, 1]} : vector<2x384xf32> to vector<2x128xf32>
    %294 = vector.broadcast %4 : vector<1x128xf32> to vector<2x128xf32>
    %295 = arith.addf %293, %294 : vector<2x128xf32>
    %296 = arith.mulf %283, %295 : vector<2x128xf32>
    %297 = arith.addf %292, %296 : vector<2x128xf32>
    %298 = math.tanh %297 : vector<2x128xf32>
    %cst_74 = arith.constant 1.000000e+00 : f32
    %299 = vector.broadcast %cst_74 : f32 to vector<2x128xf32>
    %300 = arith.subf %299, %291 : vector<2x128xf32>
    %301 = arith.mulf %300, %298 : vector<2x128xf32>
    %302 = arith.mulf %291, %265 : vector<2x128xf32>
    %303 = arith.addf %301, %302 : vector<2x128xf32>
    %cst_75 = arith.constant 0.000000e+00 : f32
    %304 = vector.broadcast %cst_75 : f32 to vector<2x128xf32>
    %305 = arith.maximumf %303, %304 : vector<2x128xf32>
    %306 = arith.index_cast %c7_i32 : i32 to index
    %c0_76 = arith.constant 0 : index
    %c0_77 = arith.constant 0 : index
    %307 = vector.load %arg5[%306, %c0_76, %c0_77] : memref<8x2x128xf32, #tpu.memory_space<vmem>>, vector<1x2x128xf32>
    %308 = vector.shape_cast %307 : vector<1x2x128xf32> to vector<2x128xf32>
    %309 = vector.shape_cast %305 : vector<2x128xf32> to vector<1x2x128xf32>
    tpu.vector_store %arg5[%306, %c0_76, %c0_77], %309 {strides = array<i32>} : memref<8x2x128xf32, #tpu.memory_space<vmem>>, vector<1x2x128xf32>,
    %c8_i32 = arith.constant 8 : i32
    %c0_78 = arith.constant 0 : index
    %c0_79 = arith.constant 0 : index
    %310 = vector.load %arg7[%c0_78, %c0_79] : memref<2x128xf32, #tpu.memory_space<vmem>>, vector<2x128xf32>
    tpu.vector_store %arg7[%c0_78, %c0_79], %303 {strides = array<i32>} : memref<2x128xf32, #tpu.memory_space<vmem>>, vector<2x128xf32>,
    %c0_i32_80 = arith.constant 0 : i32
    %311 = arith.cmpi eq, %arg1, %c0_i32_80 : i32
    %312 = arith.extui %311 : i1 to i32
    %c0_i32_81 = arith.constant 0 : i32
    %313 = arith.cmpi ne, %312, %c0_i32_81 : i32
    scf.if %313 {
      %c0_82 = arith.constant 0 : index
      %c0_83 = arith.constant 0 : index
      %c0_84 = arith.constant 0 : index
      %314 = vector.load %arg6[%c0_82, %c0_83, %c0_84] : memref<1x2x128xf32, #tpu.memory_space<vmem>>, vector<1x2x128xf32>
      %315 = vector.shape_cast %314 : vector<1x2x128xf32> to vector<2x128xf32>
      %316 = vector.shape_cast %303 : vector<2x128xf32> to vector<1x2x128xf32>
      tpu.vector_store %arg6[%c0_82, %c0_83, %c0_84], %316 {strides = array<i32>} : memref<1x2x128xf32, #tpu.memory_space<vmem>>, vector<1x2x128xf32>,
    } else {
    }
    return
  }
  func.func @transform_0(%arg0: i32, %arg1: i32) -> (i32, i32, i32) {
    %c0_i32 = arith.constant 0 : i32
    %c0_i32_0 = arith.constant 0 : i32
    return %arg1, %arg0, %c0_i32 : i32, i32, i32
  }
  func.func @transform_1(%arg0: i32, %arg1: i32) -> (i32, i32) {
    %c0_i32 = arith.constant 0 : i32
    %c0_i32_0 = arith.constant 0 : i32
    %c0_i32_1 = arith.constant 0 : i32
    return %c0_i32, %c0_i32_0 : i32, i32
  }
  func.func @transform_2(%arg0: i32, %arg1: i32) -> (i32, i32) {
    %c0_i32 = arith.constant 0 : i32
    %c0_i32_0 = arith.constant 0 : i32
    %c0_i32_1 = arith.constant 0 : i32
    return %c0_i32, %c0_i32_0 : i32, i32
  }
  func.func @transform_3(%arg0: i32, %arg1: i32) -> (i32, i32, i32) {
    %c0_i32 = arith.constant 0 : i32
    %c0_i32_0 = arith.constant 0 : i32
    return %arg1, %arg0, %c0_i32 : i32, i32, i32
  }
  func.func @transform_4(%arg0: i32, %arg1: i32) -> (i32, i32, i32) {
    %c0_i32 = arith.constant 0 : i32
    %c0_i32_0 = arith.constant 0 : i32
    %c0_i32_1 = arith.constant 0 : i32
    return %c0_i32, %arg0, %c0_i32_0 : i32, i32, i32
  }
}

</mosaic_0001>

<llo_original>
// kernel: recovery_net_forward.1
$region0: #{recovery_net_forward.1}
  #allocation0 [shape = 'u32[]', space=smem, size = 0x4, offset = 0x4, fixed_abs, tag = 'smem constant byte address 0x4 - core index']
  #allocation1 [shape = 'u32[144,128]{1,0:T(1,128)}', space=vmem, size = 0x12000, scoped, tag = 'internal scratch']
  #allocation2 [shape = 'f32[2,128]{1,0:T(2,128)}', space=vmem, size = 0x400, scoped, tag = 'scratch operand']
  %s0 = inlined_call_operand.vmem [shape: f32[8,2,384], index: 0, kind: input, shape index: {}]
  %s1 = inlined_call_operand.vmem [shape: f32[128,384], index: 1, kind: input, shape index: {}]
  %s2 = inlined_call_operand.vmem [shape: f32[1,128], index: 2, kind: input, shape index: {}]
  %s3 = inlined_call_operand.vmem [shape: f32[8,2,128], index: 3, kind: output, shape index: {0}]
  %s4 = inlined_call_operand.hbm [shape: f32[1,2,128], index: 4, kind: output, shape index: {1}]
  %5 = xla_tuple %s3, %s4
  %s6 = sld [smem:[#allocation0]]
  $region38: #{recovery_net_forward.1} parent=0
    _
  %s8 = ssub.s32 1, %s6
  %s9 = scalar_select 0, %s8, %s6
  $region1: #{recovery_net_forward.1} parent=0
    #allocation3 [shape = 'u8[1024]{0}', space=vmem, size = 0x400, scoped, tag = 'output window, operand 1, single buffered']
    #allocation4 [shape = 's32[1]{0}', space=sflag, size = 0x4, scoped, tag = 'scoped memory for recovery_net_forward.1']
    %10 = vsyncpa [#allocation4], 0
    // Predicated region
    $region2: #{recovery_net_forward.1} parent=1 // pred_check
      _
    $region3: #{recovery_net_forward.1} parent=1 // pred_check_branch
      %12 = sbr.rel (0) target = $region5
    $region4: #{recovery_net_forward.1} parent=1 // pred_region
      _
    $region5: #{recovery_net_forward.1} parent=1 // pred_fallthru
      _
    // Predicated region
    $region6: #{recovery_net_forward.1} parent=1 // pred_check
      _
    $region7: #{recovery_net_forward.1} parent=1 // pred_check_branch
      %14 = sbr.rel (0) target = $region9
    $region8: #{recovery_net_forward.1} parent=1 // pred_region
      _
    $region9: #{recovery_net_forward.1} parent=1 // pred_fallthru
      _
    // Predicated region
    $region10: #{recovery_net_forward.1} parent=1 // pred_check
      _
    $region11: #{recovery_net_forward.1} parent=1 // pred_check_branch
      %16 = sbr.rel (0) target = $region13
    $region12: #{recovery_net_forward.1} parent=1 // pred_region
      _
    $region13: #{recovery_net_forward.1} parent=1 // pred_fallthru
      _
    %p17 = scmp.eq.s32.totalorder 0, 0
    // Predicated region
    $region14: #{recovery_net_forward.1} parent=1 // pred_check
      %p18 = pneg %p17
    $region15: #{recovery_net_forward.1} parent=1 // pred_check_branch
      %20 = sbr.rel (%p18) target = $region17
    $region16: #{recovery_net_forward.1} parent=1 // pred_region
      %21 = vst [vmem:[#allocation2] sm:$0x3] 0.0
    $region17: #{recovery_net_forward.1} parent=1 // pred_fallthru
      _
    %v22 = vld [vmem:[%s1] sm:$0xff]
    %v23 = vld [vmem:[%s1 + $0x8] sm:$0xff]
    %v24 = vld [vmem:[%s1 + $0x10] sm:$0xff]
    %v25 = vld [vmem:[%s1 + $0x18] sm:$0xff]
    %v26 = vld [vmem:[%s1 + $0x20] sm:$0xff]
    %v27 = vld [vmem:[%s1 + $0x28] sm:$0xff]
    %v28 = vld [vmem:[%s1 + $0x30] sm:$0xff]
    %v29 = vld [vmem:[%s1 + $0x38] sm:$0xff]
    %v30 = vld [vmem:[%s1 + $0x40] sm:$0xff]
    %v31 = vld [vmem:[%s1 + $0x48] sm:$0xff]
    %v32 = vld [vmem:[%s1 + $0x50] sm:$0xff]
    %v33 = vld [vmem:[%s1 + $0x58] sm:$0xff]
    %v34 = vld [vmem:[%s1 + $0x60] sm:$0xff]
    %v35 = vld [vmem:[%s1 + $0x68] sm:$0xff]
    %v36 = vld [vmem:[%s1 + $0x70] sm:$0xff]
    %v37 = vld [vmem:[%s1 + $0x78] sm:$0xff]
    %v38 = vld [vmem:[%s1 + $0x80] sm:$0xff]
    %v39 = vld [vmem:[%s1 + $0x88] sm:$0xff]
    %v40 = vld [vmem:[%s1 + $0x90] sm:$0xff]
    %v41 = vld [vmem:[%s1 + $0x98] sm:$0xff]
    %v42 = vld [vmem:[%s1 + $0xa0] sm:$0xff]
    %v43 = vld [vmem:[%s1 + $0xa8] sm:$0xff]
    %v44 = vld [vmem:[%s1 + $0xb0] sm:$0xff]
    %v45 = vld [vmem:[%s1 + $0xb8] sm:$0xff]
    %v46 = vld [vmem:[%s1 + $0xc0] sm:$0xff]
    %v47 = vld [vmem:[%s1 + $0xc8] sm:$0xff]
    %v48 = vld [vmem:[%s1 + $0xd0] sm:$0xff]
    %v49 = vld [vmem:[%s1 + $0xd8] sm:$0xff]
    %v50 = vld [vmem:[%s1 + $0xe0] sm:$0xff]
    %v51 = vld [vmem:[%s1 + $0xe8] sm:$0xff]
    %v52 = vld [vmem:[%s1 + $0xf0] sm:$0xff]
    %v53 = vld [vmem:[%s1 + $0xf8] sm:$0xff]
    %v54 = vld [vmem:[%s1 + $0x100] sm:$0xff]
    %v55 = vld [vmem:[%s1 + $0x108] sm:$0xff]
    %v56 = vld [vmem:[%s1 + $0x110] sm:$0xff]
    %v57 = vld [vmem:[%s1 + $0x118] sm:$0xff]
    %v58 = vld [vmem:[%s1 + $0x120] sm:$0xff]
    %v59 = vld [vmem:[%s1 + $0x128] sm:$0xff]
    %v60 = vld [vmem:[%s1 + $0x130] sm:$0xff]
    %v61 = vld [vmem:[%s1 + $0x138] sm:$0xff]
    %v62 = vld [vmem:[%s1 + $0x140] sm:$0xff]
    %v63 = vld [vmem:[%s1 + $0x148] sm:$0xff]
    %v64 = vld [vmem:[%s1 + $0x150] sm:$0xff]
    %v65 = vld [vmem:[%s1 + $0x158] sm:$0xff]
    %v66 = vld [vmem:[%s1 + $0x160] sm:$0xff]
    %v67 = vld [vmem:[%s1 + $0x168] sm:$0xff]
    %v68 = vld [vmem:[%s1 + $0x170] sm:$0xff]
    %v69 = vld [vmem:[%s1 + $0x178] sm:$0xff]
    %v70 = vld [vmem:[%s2] sm:$0x1]
    %v71 = vld [vmem:[#allocation2] sm:$0x3]
    %v72 = vld [vmem:[%s0] sm:$0x3f]
    %73 = vmatprep.subr.mxu0 %v23
    %74 = vmatpush1.msra.mxu0 %v22
    %75 = vmatprep.subr.mxu0 %v26
    %76 = vmatpush1.msra.mxu0 %v25
    %77 = vmatprep.subr.mxu0 %v29
    %78 = vmatpush1.msra.mxu0 %v28
    %79 = vmatprep.subr.mxu0 %v32
    %80 = vmatpush1.msra.mxu0 %v31
    %81 = vmatprep.subr.mxu0 %v35
    %82 = vmatpush1.msra.mxu0 %v34
    %83 = vmatprep.subr.mxu0 %v38
    %84 = vmatpush1.msra.mxu0 %v37
    %85 = vmatprep.subr.mxu0 %v41
    %86 = vmatpush1.msra.mxu0 %v40
    %87 = vmatprep.subr.mxu0 %v44
    %88 = vmatpush1.msra.mxu0 %v43
    %89 = vmatprep.subr.mxu0 %v47
    %90 = vmatpush1.msra.mxu0 %v46
    %91 = vmatprep.subr.mxu0 %v50
    %92 = vmatpush1.msra.mxu0 %v49
    %93 = vmatprep.subr.mxu0 %v53
    %94 = vmatpush1.msra.mxu0 %v52
    %95 = vmatprep.subr.mxu0 %v56
    %96 = vmatpush1.msra.mxu0 %v55
    %97 = vmatprep.subr.mxu0 %v59
    %98 = vmatpush1.msra.mxu0 %v58
    %99 = vmatprep.subr.mxu0 %v62
    %100 = vmatpush1.msra.mxu0 %v61
    %101 = vmatprep.subr.mxu0 %v65
    %102 = vmatpush1.msra.mxu0 %v64
    %103 = vmatprep.subr.mxu0 %v68
    %104 = vmatpush1.msra.mxu0 %v67
    %105 = vmatprep.subr.mxu0 0.0
    %106 = vmatpush1.msra.mxu0 0.0
    %107 = vmatprep.subr.mxu0 0.0
    %108 = vmatpush1.msra.mxu0 0.0
    %109 = vmatprep.subr.mxu0 0.0
    %110 = vmatpush1.msra.mxu0 0.0
    %111 = vmatprep.subr.mxu0 0.0
    %112 = vmatpush1.msra.mxu0 0.0
    %113 = vmatprep.subr.mxu0 0.0
    %114 = vmatpush1.msra.mxu0 0.0
    %115 = vmatprep.subr.mxu0 0.0
    %116 = vmatpush1.msra.mxu0 0.0
    %117 = vmatprep.subr.mxu0 0.0
    %118 = vmatpush1.msra.mxu0 0.0
    %119 = vmatprep.subr.mxu0 0.0
    %120 = vmatpush1.msra.mxu0 0.0
    %121 = vmatprep.subr.mxu0 0.0
    %122 = vmatpush1.msra.mxu0 0.0
    %123 = vmatprep.subr.mxu0 0.0
    %124 = vmatpush1.msra.mxu0 0.0
    %125 = vmatprep.subr.mxu0 0.0
    %126 = vmatpush1.msra.mxu0 0.0
    %127 = vmatprep.subr.mxu0 0.0
    %128 = vmatpush1.msra.mxu0 0.0
    %129 = vmatprep.subr.mxu0 0.0
    %130 = vmatpush1.msra.mxu0 0.0
    %131 = vmatprep.subr.mxu0 0.0
    %132 = vmatpush1.msra.mxu0 0.0
    %133 = vmatprep.subr.mxu0 0.0
    %134 = vmatpush1.msra.mxu0 0.0
    %135 = vmatprep.subr.mxu0 0.0
    %136 = vmatpush1.msra.mxu0 0.0
    %137 = vmatprep.mubr.f32.mxu0 0.0
    %138 = vmatmul.mubr.f32.gmra.mrb[0].mxu0 %v71
    %v139 = vpop.f32.mrb[0].mxu0
    %v140 = vadd.f32 0.0, %v139
    %v141 = vpop.f32.mrb[0].mxu0
    %v142 = vadd.f32 0.0, %v141
    %143 = vdwg.mxu0
    %144 = vmatprep.subr.mxu0 0.0
    %145 = vmatpush1.msra.mxu0 %v24
    %146 = vmatprep.subr.mxu0 0.0
    %147 = vmatpush1.msra.mxu0 %v27
    %148 = vmatprep.subr.mxu0 0.0
    %149 = vmatpush1.msra.mxu0 %v30
    %150 = vmatprep.subr.mxu0 0.0
    %151 = vmatpush1.msra.mxu0 %v33
    %152 = vmatprep.subr.mxu0 0.0
    %153 = vmatpush1.msra.mxu0 %v36
    %154 = vmatprep.subr.mxu0 0.0
    %155 = vmatpush1.msra.mxu0 %v39
    %156 = vmatprep.subr.mxu0 0.0
    %157 = vmatpush1.msra.mxu0 %v42
    %158 = vmatprep.subr.mxu0 0.0
    %159 = vmatpush1.msra.mxu0 %v45
    %160 = vmatprep.subr.mxu0 0.0
    %161 = vmatpush1.msra.mxu0 %v48
    %162 = vmatprep.subr.mxu0 0.0
    %163 = vmatpush1.msra.mxu0 %v51
    %164 = vmatprep.subr.mxu0 0.0
    %165 = vmatpush1.msra.mxu0 %v54
    %166 = vmatprep.subr.mxu0 0.0
    %167 = vmatpush1.msra.mxu0 %v57
    %168 = vmatprep.subr.mxu0 0.0
    %169 = vmatpush1.msra.mxu0 %v60
    %170 = vmatprep.subr.mxu0 0.0
    %171 = vmatpush1.msra.mxu0 %v63
    %172 = vmatprep.subr.mxu0 0.0
    %173 = vmatpush1.msra.mxu0 %v66
    %174 = vmatprep.subr.mxu0 0.0
    %175 = vmatpush1.msra.mxu0 %v69
    %176 = vmatprep.subr.mxu0 0.0
    %177 = vmatpush1.msra.mxu0 0.0
    %178 = vmatprep.subr.mxu0 0.0
    %179 = vmatpush1.msra.mxu0 0.0
    %180 = vmatprep.subr.mxu0 0.0
    %181 = vmatpush1.msra.mxu0 0.0
    %182 = vmatprep.subr.mxu0 0.0
    %183 = vmatpush1.msra.mxu0 0.0
    %184 = vmatprep.subr.mxu0 0.0
    %185 = vmatpush1.msra.mxu0 0.0
    %186 = vmatprep.subr.mxu0 0.0
    %187 = vmatpush1.msra.mxu0 0.0
    %188 = vmatprep.subr.mxu0 0.0
    %189 = vmatpush1.msra.mxu0 0.0
    %190 = vmatprep.subr.mxu0 0.0
    %191 = vmatpush1.msra.mxu0 0.0
    %192 = vmatprep.subr.mxu0 0.0
    %193 = vmatpush1.msra.mxu0 0.0
    %194 = vmatprep.subr.mxu0 0.0
    %195 = vmatpush1.msra.mxu0 0.0
    %196 = vmatprep.subr.mxu0 0.0
    %197 = vmatpush1.msra.mxu0 0.0
    %198 = vmatprep.subr.mxu0 0.0
    %199 = vmatpush1.msra.mxu0 0.0
    %200 = vmatprep.subr.mxu0 0.0
    %201 = vmatpush1.msra.mxu0 0.0
    %202 = vmatprep.subr.mxu0 0.0
    %203 = vmatpush1.msra.mxu0 0.0
    %204 = vmatprep.subr.mxu0 0.0
    %205 = vmatpush1.msra.mxu0 0.0
    %206 = vmatprep.subr.mxu0 0.0
    %207 = vmatpush1.msra.mxu0 0.0
    %208 = vmatprep.mubr.f32.mxu0 0.0
    %209 = vmatmul.mubr.f32.gmra.mrb[0].mxu0 %v71
    %v210 = vpop.f32.mrb[0].mxu0
    %v211 = vadd.f32 0.0, %v210
    %v212 = vpop.f32.mrb[0].mxu0
    %213 = vdwg.mxu0
    %v214 = vadd.f32 %v72, %v140
    %v215 = vxor.u32 %v214, 2147483648
    %v216 = vmul.f32 %v215, 1.442695
    %v217 = vpow.pop %v216
    %v218 = vadd.f32 %v217, 1.0
    %v219 = vrcp.pop %v218
    %v220 = vmul.f32 1.0, %v219
    %v222 = vrot.slane %v72, 2
    %v224 = vadd.f32 %v222, %v142
    %v225 = vxor.u32 %v224, 2147483648
    %v226 = vmul.f32 %v225, 1.442695
    %v227 = vpow.pop %v226
    %v228 = vadd.f32 %v227, 1.0
    %v229 = vrcp.pop %v228
    %v230 = vmul.f32 1.0, %v229
    %v232 = vlaneseq
    %v233 = vshrl.u32 %v232, 7
    %v234 = vsub.s32 0, %v233
    %v235 = vrot.slane %v70, %v234
    %v237 = vadd.f32 %v211, %v235
    %v238 = vmul.f32 %v220, %v237
    %v239 = vrot.slane %v72, 4
    %v241 = vadd.f32 %v239, %v238
    %v242 = vtanh.pop %v241
    %v243 = vsub.f32 1.0, %v230
    %v244 = vmul.f32 %v243, %v242
    %v245 = vmul.f32 %v230, %v71
    %v246 = vadd.f32 %v244, %v245
    %v247 = vmax.f32 %v246, 0.0
    %248 = vst [vmem:[%s3] sm:$0x3] %v247
    %s249 = scalar_lea.vmem %s0, 6
    %v250 = vld [vmem:[%s249] sm:$0x3f]
    %251 = vmatprep.subr.mxu0 %v23
    %252 = vmatpush1.msra.mxu0 %v22
    %253 = vmatprep.subr.mxu0 %v26
    %254 = vmatpush1.msra.mxu0 %v25
    %255 = vmatprep.subr.mxu0 %v29
    %256 = vmatpush1.msra.mxu0 %v28
    %257 = vmatprep.subr.mxu0 %v32
    %258 = vmatpush1.msra.mxu0 %v31
    %259 = vmatprep.subr.mxu0 %v35
    %260 = vmatpush1.msra.mxu0 %v34
    %261 = vmatprep.subr.mxu0 %v38
    %262 = vmatpush1.msra.mxu0 %v37
    %263 = vmatprep.subr.mxu0 %v41
    %264 = vmatpush1.msra.mxu0 %v40
    %265 = vmatprep.subr.mxu0 %v44
    %266 = vmatpush1.msra.mxu0 %v43
    %267 = vmatprep.subr.mxu0 %v47
    %268 = vmatpush1.msra.mxu0 %v46
    %269 = vmatprep.subr.mxu0 %v50
    %270 = vmatpush1.msra.mxu0 %v49
    %271 = vmatprep.subr.mxu0 %v53
    %272 = vmatpush1.msra.mxu0 %v52
    %273 = vmatprep.subr.mxu0 %v56
    %274 = vmatpush1.msra.mxu0 %v55
    %275 = vmatprep.subr.mxu0 %v59
    %276 = vmatpush1.msra.mxu0 %v58
    %277 = vmatprep.subr.mxu0 %v62
    %278 = vmatpush1.msra.mxu0 %v61
    %279 = vmatprep.subr.mxu0 %v65
    %280 = vmatpush1.msra.mxu0 %v64
    %281 = vmatprep.subr.mxu0 %v68
    %282 = vmatpush1.msra.mxu0 %v67
    %283 = vmatprep.subr.mxu0 0.0
    %284 = vmatpush1.msra.mxu0 0.0
    %285 = vmatprep.subr.mxu0 0.0
    %286 = vmatpush1.msra.mxu0 0.0
    %287 = vmatprep.subr.mxu0 0.0
    %288 = vmatpush1.msra.mxu0 0.0
    %289 = vmatprep.subr.mxu0 0.0
    %290 = vmatpush1.msra.mxu0 0.0
    %291 = vmatprep.subr.mxu0 0.0
    %292 = vmatpush1.msra.mxu0 0.0
    %293 = vmatprep.subr.mxu0 0.0
    %294 = vmatpush1.msra.mxu0 0.0
    %295 = vmatprep.subr.mxu0 0.0
    %296 = vmatpush1.msra.mxu0 0.0
    %297 = vmatprep.subr.mxu0 0.0
    %298 = vmatpush1.msra.mxu0 0.0
    %299 = vmatprep.subr.mxu0 0.0
    %300 = vmatpush1.msra.mxu0 0.0
    %301 = vmatprep.subr.mxu0 0.0
    %302 = vmatpush1.msra.mxu0 0.0
    %303 = vmatprep.subr.mxu0 0.0
    %304 = vmatpush1.msra.mxu0 0.0
    %305 = vmatprep.subr.mxu0 0.0
    %306 = vmatpush1.msra.mxu0 0.0
    %307 = vmatprep.subr.mxu0 0.0
    %308 = vmatpush1.msra.mxu0 0.0
    %309 = vmatprep.subr.mxu0 0.0
    %310 = vmatpush1.msra.mxu0 0.0
    %311 = vmatprep.subr.mxu0 0.0
    %312 = vmatpush1.msra.mxu0 0.0
    %313 = vmatprep.subr.mxu0 0.0
    %314 = vmatpush1.msra.mxu0 0.0
    %315 = vmatprep.mubr.f32.mxu0 0.0
    %316 = vmatmul.mubr.f32.gmra.mrb[0].mxu0 %v246
    %v317 = vpop.f32.mrb[0].mxu0
    %v318 = vadd.f32 0.0, %v317
    %v319 = vpop.f32.mrb[0].mxu0
    %v320 = vadd.f32 0.0, %v319
    %321 = vdwg.mxu0
    %322 = vmatprep.subr.mxu0 0.0
    %323 = vmatpush1.msra.mxu0 %v24
    %324 = vmatprep.subr.mxu0 0.0
    %325 = vmatpush1.msra.mxu0 %v27
    %326 = vmatprep.subr.mxu0 0.0
    %327 = vmatpush1.msra.mxu0 %v30
    %328 = vmatprep.subr.mxu0 0.0
    %329 = vmatpush1.msra.mxu0 %v33
    %330 = vmatprep.subr.mxu0 0.0
    %331 = vmatpush1.msra.mxu0 %v36
    %332 = vmatprep.subr.mxu0 0.0
    %333 = vmatpush1.msra.mxu0 %v39
    %334 = vmatprep.subr.mxu0 0.0
    %335 = vmatpush1.msra.mxu0 %v42
    %336 = vmatprep.subr.mxu0 0.0
    %337 = vmatpush1.msra.mxu0 %v45
    %338 = vmatprep.subr.mxu0 0.0
    %339 = vmatpush1.msra.mxu0 %v48
    %340 = vmatprep.subr.mxu0 0.0
    %341 = vmatpush1.msra.mxu0 %v51
    %342 = vmatprep.subr.mxu0 0.0
    %343 = vmatpush1.msra.mxu0 %v54
    %344 = vmatprep.subr.mxu0 0.0
    %345 = vmatpush1.msra.mxu0 %v57
    %346 = vmatprep.subr.mxu0 0.0
    %347 = vmatpush1.msra.mxu0 %v60
    %348 = vmatprep.subr.mxu0 0.0
    %349 = vmatpush1.msra.mxu0 %v63
    %350 = vmatprep.subr.mxu0 0.0
    %351 = vmatpush1.msra.mxu0 %v66
    %352 = vmatprep.subr.mxu0 0.0
    %353 = vmatpush1.msra.mxu0 %v69
    %354 = vmatprep.subr.mxu0 0.0
    %355 = vmatpush1.msra.mxu0 0.0
    %356 = vmatprep.subr.mxu0 0.0
    %357 = vmatpush1.msra.mxu0 0.0
    %358 = vmatprep.subr.mxu0 0.0
    %359 = vmatpush1.msra.mxu0 0.0
    %360 = vmatprep.subr.mxu0 0.0
    %361 = vmatpush1.msra.mxu0 0.0
    %362 = vmatprep.subr.mxu0 0.0
    %363 = vmatpush1.msra.mxu0 0.0
    %364 = vmatprep.subr.mxu0 0.0
    %365 = vmatpush1.msra.mxu0 0.0
    %366 = vmatprep.subr.mxu0 0.0
    %367 = vmatpush1.msra.mxu0 0.0
    %368 = vmatprep.subr.mxu0 0.0
    %369 = vmatpush1.msra.mxu0 0.0
    %370 = vmatprep.subr.mxu0 0.0
    %371 = vmatpush1.msra.mxu0 0.0
    %372 = vmatprep.subr.mxu0 0.0
    %373 = vmatpush1.msra.mxu0 0.0
    %374 = vmatprep.subr.mxu0 0.0
    %375 = vmatpush1.msra.mxu0 0.0
    %376 = vmatprep.subr.mxu0 0.0
    %377 = vmatpush1.msra.mxu0 0.0
    %378 = vmatprep.subr.mxu0 0.0
    %379 = vmatpush1.msra.mxu0 0.0
    %380 = vmatprep.subr.mxu0 0.0
    %381 = vmatpush1.msra.mxu0 0.0
    %382 = vmatprep.subr.mxu0 0.0
    %383 = vmatpush1.msra.mxu0 0.0
    %384 = vmatprep.subr.mxu0 0.0
    %385 = vmatpush1.msra.mxu0 0.0
    %386 = vmatprep.mubr.f32.mxu0 0.0
    %387 = vmatmul.mubr.f32.gmra.mrb[0].mxu0 %v246
    %v388 = vpop.f32.mrb[0].mxu0
    %v389 = vadd.f32 0.0, %v388
    %v390 = vpop.f32.mrb[0].mxu0
    %391 = vdwg.mxu0
    %v392 = vadd.f32 %v250, %v318
    %v393 = vxor.u32 %v392, 2147483648
    %v394 = vmul.f32 %v393, 1.442695
    %v395 = vpow.pop %v394
    %v396 = vadd.f32 %v395, 1.0
    %v397 = vrcp.pop %v396
    %v398 = vmul.f32 1.0, %v397
    %v400 = vrot.slane %v250, 2
    %v402 = vadd.f32 %v400, %v320
    %v403 = vxor.u32 %v402, 2147483648
    %v404 = vmul.f32 %v403, 1.442695
    %v405 = vpow.pop %v404
    %v406 = vadd.f32 %v405, 1.0
    %v407 = vrcp.pop %v406
    %v408 = vmul.f32 1.0, %v407
    %v409 = vadd.f32 %v389, %v235
    %v410 = vmul.f32 %v398, %v409
    %v411 = vrot.slane %v250, 4
    %v413 = vadd.f32 %v411, %v410
    %v414 = vtanh.pop %v413
    %v415 = vsub.f32 1.0, %v408
    %v416 = vmul.f32 %v415, %v414
    %v417 = vmul.f32 %v408, %v246
    %v418 = vadd.f32 %v416, %v417
    %v419 = vmax.f32 %v418, 0.0
    %s420 = scalar_lea.vmem %s3, 2
    %421 = vst [vmem:[%s420] sm:$0x3] %v419
    %s422 = scalar_lea.vmem %s0, 12
    %v423 = vld [vmem:[%s422] sm:$0x3f]
    %424 = vmatprep.subr.mxu0 %v23
    %425 = vmatpush1.msra.mxu0 %v22
    %426 = vmatprep.subr.mxu0 %v26
    %427 = vmatpush1.msra.mxu0 %v25
    %428 = vmatprep.subr.mxu0 %v29
    %429 = vmatpush1.msra.mxu0 %v28
    %430 = vmatprep.subr.mxu0 %v32
    %431 = vmatpush1.msra.mxu0 %v31
    %432 = vmatprep.subr.mxu0 %v35
    %433 = vmatpush1.msra.mxu0 %v34
    %434 = vmatprep.subr.mxu0 %v38
    %435 = vmatpush1.msra.mxu0 %v37
    %436 = vmatprep.subr.mxu0 %v41
    %437 = vmatpush1.msra.mxu0 %v40
    %438 = vmatprep.subr.mxu0 %v44
    %439 = vmatpush1.msra.mxu0 %v43
    %440 = vmatprep.subr.mxu0 %v47
    %441 = vmatpush1.msra.mxu0 %v46
    %442 = vmatprep.subr.mxu0 %v50
    %443 = vmatpush1.msra.mxu0 %v49
    %444 = vmatprep.subr.mxu0 %v53
    %445 = vmatpush1.msra.mxu0 %v52
    %446 = vmatprep.subr.mxu0 %v56
    %447 = vmatpush1.msra.mxu0 %v55
    %448 = vmatprep.subr.mxu0 %v59
    %449 = vmatpush1.msra.mxu0 %v58
    %450 = vmatprep.subr.mxu0 %v62
    %451 = vmatpush1.msra.mxu0 %v61
    %452 = vmatprep.subr.mxu0 %v65
    %453 = vmatpush1.msra.mxu0 %v64
    %454 = vmatprep.subr.mxu0 %v68
    %455 = vmatpush1.msra.mxu0 %v67
    %456 = vmatprep.subr.mxu0 0.0
    %457 = vmatpush1.msra.mxu0 0.0
    %458 = vmatprep.subr.mxu0 0.0
    %459 = vmatpush1.msra.mxu0 0.0
    %460 = vmatprep.subr.mxu0 0.0
    %461 = vmatpush1.msra.mxu0 0.0
    %462 = vmatprep.subr.mxu0 0.0
    %463 = vmatpush1.msra.mxu0 0.0
    %464 = vmatprep.subr.mxu0 0.0
    %465 = vmatpush1.msra.mxu0 0.0
    %466 = vmatprep.subr.mxu0 0.0
    %467 = vmatpush1.msra.mxu0 0.0
    %468 = vmatprep.subr.mxu0 0.0
    %469 = vmatpush1.msra.mxu0 0.0
    %470 = vmatprep.subr.mxu0 0.0
    %471 = vmatpush1.msra.mxu0 0.0
    %472 = vmatprep.subr.mxu0 0.0
    %473 = vmatpush1.msra.mxu0 0.0
    %474 = vmatprep.subr.mxu0 0.0
    %475 = vmatpush1.msra.mxu0 0.0
    %476 = vmatprep.subr.mxu0 0.0
    %477 = vmatpush1.msra.mxu0 0.0
    %478 = vmatprep.subr.mxu0 0.0
    %479 = vmatpush1.msra.mxu0 0.0
    %480 = vmatprep.subr.mxu0 0.0
    %481 = vmatpush1.msra.mxu0 0.0
    %482 = vmatprep.subr.mxu0 0.0
    %483 = vmatpush1.msra.mxu0 0.0
    %484 = vmatprep.subr.mxu0 0.0
    %485 = vmatpush1.msra.mxu0 0.0
    %486 = vmatprep.subr.mxu0 0.0
    %487 = vmatpush1.msra.mxu0 0.0
    %488 = vmatprep.mubr.f32.mxu0 0.0
    %489 = vmatmul.mubr.f32.gmra.mrb[0].mxu0 %v418
    %v490 = vpop.f32.mrb[0].mxu0
    %v491 = vadd.f32 0.0, %v490
    %v492 = vpop.f32.mrb[0].mxu0
    %v493 = vadd.f32 0.0, %v492
    %494 = vdwg.mxu0
    %495 = vmatprep.subr.mxu0 0.0
    %496 = vmatpush1.msra.mxu0 %v24
    %497 = vmatprep.subr.mxu0 0.0
    %498 = vmatpush1.msra.mxu0 %v27
    %499 = vmatprep.subr.mxu0 0.0
    %500 = vmatpush1.msra.mxu0 %v30
    %501 = vmatprep.subr.mxu0 0.0
    %502 = vmatpush1.msra.mxu0 %v33
    %503 = vmatprep.subr.mxu0 0.0
    %504 = vmatpush1.msra.mxu0 %v36
    %505 = vmatprep.subr.mxu0 0.0
    %506 = vmatpush1.msra.mxu0 %v39
    %507 = vmatprep.subr.mxu0 0.0
    %508 = vmatpush1.msra.mxu0 %v42
    %509 = vmatprep.subr.mxu0 0.0
    %510 = vmatpush1.msra.mxu0 %v45
    %511 = vmatprep.subr.mxu0 0.0
    %512 = vmatpush1.msra.mxu0 %v48
    %513 = vmatprep.subr.mxu0 0.0
    %514 = vmatpush1.msra.mxu0 %v51
    %515 = vmatprep.subr.mxu0 0.0
    %516 = vmatpush1.msra.mxu0 %v54
    %517 = vmatprep.subr.mxu0 0.0
    %518 = vmatpush1.msra.mxu0 %v57
    %519 = vmatprep.subr.mxu0 0.0
    %520 = vmatpush1.msra.mxu0 %v60
    %521 = vmatprep.subr.mxu0 0.0
    %522 = vmatpush1.msra.mxu0 %v63
    %523 = vmatprep.subr.mxu0 0.0
    %524 = vmatpush1.msra.mxu0 %v66
    %525 = vmatprep.subr.mxu0 0.0
    %526 = vmatpush1.msra.mxu0 %v69
    %527 = vmatprep.subr.mxu0 0.0
    %528 = vmatpush1.msra.mxu0 0.0
    %529 = vmatprep.subr.mxu0 0.0
    %530 = vmatpush1.msra.mxu0 0.0
    %531 = vmatprep.subr.mxu0 0.0
    %532 = vmatpush1.msra.mxu0 0.0
    %533 = vmatprep.subr.mxu0 0.0
    %534 = vmatpush1.msra.mxu0 0.0
    %535 = vmatprep.subr.mxu0 0.0
    %536 = vmatpush1.msra.mxu0 0.0
    %537 = vmatprep.subr.mxu0 0.0
    %538 = vmatpush1.msra.mxu0 0.0
    %539 = vmatprep.subr.mxu0 0.0
    %540 = vmatpush1.msra.mxu0 0.0
    %541 = vmatprep.subr.mxu0 0.0
    %542 = vmatpush1.msra.mxu0 0.0
    %543 = vmatprep.subr.mxu0 0.0
    %544 = vmatpush1.msra.mxu0 0.0
    %545 = vmatprep.subr.mxu0 0.0
    %546 = vmatpush1.msra.mxu0 0.0
    %547 = vmatprep.subr.mxu0 0.0
    %548 = vmatpush1.msra.mxu0 0.0
    %549 = vmatprep.subr.mxu0 0.0
    %550 = vmatpush1.msra.mxu0 0.0
    %551 = vmatprep.subr.mxu0 0.0
    %552 = vmatpush1.msra.mxu0 0.0
    %553 = vmatprep.subr.mxu0 0.0
    %554 = vmatpush1.msra.mxu0 0.0
    %555 = vmatprep.subr.mxu0 0.0
    %556 = vmatpush1.msra.mxu0 0.0
    %557 = vmatprep.subr.mxu0 0.0
    %558 = vmatpush1.msra.mxu0 0.0
    %559 = vmatprep.mubr.f32.mxu0 0.0
    %560 = vmatmul.mubr.f32.gmra.mrb[0].mxu0 %v418
    %v561 = vpop.f32.mrb[0].mxu0
    %v562 = vadd.f32 0.0, %v561
    %v563 = vpop.f32.mrb[0].mxu0
    %564 = vdwg.mxu0
    %v565 = vadd.f32 %v423, %v491
    %v566 = vxor.u32 %v565, 2147483648
    %v567 = vmul.f32 %v566, 1.442695
    %v568 = vpow.pop %v567
    %v569 = vadd.f32 %v568, 1.0
    %v570 = vrcp.pop %v569
    %v571 = vmul.f32 1.0, %v570
    %v573 = vrot.slane %v423, 2
    %v575 = vadd.f32 %v573, %v493
    %v576 = vxor.u32 %v575, 2147483648
    %v577 = vmul.f32 %v576, 1.442695
    %v578 = vpow.pop %v577
    %v579 = vadd.f32 %v578, 1.0
    %v580 = vrcp.pop %v579
    %v581 = vmul.f32 1.0, %v580
    %v582 = vadd.f32 %v562, %v235
    %v583 = vmul.f32 %v571, %v582
    %v584 = vrot.slane %v423, 4
    %v586 = vadd.f32 %v584, %v583
    %v587 = vtanh.pop %v586
    %v588 = vsub.f32 1.0, %v581
    %v589 = vmul.f32 %v588, %v587
    %v590 = vmul.f32 %v581, %v418
    %v591 = vadd.f32 %v589, %v590
    %v592 = vmax.f32 %v591, 0.0
    %s593 = scalar_lea.vmem %s3, 4
    %594 = vst [vmem:[%s593] sm:$0x3] %v592
    %s595 = scalar_lea.vmem %s0, 18
    %v596 = vld [vmem:[%s595] sm:$0x3f]
    %597 = vmatprep.subr.mxu0 %v23
    %598 = vmatpush1.msra.mxu0 %v22
    %599 = vmatprep.subr.mxu0 %v26
    %600 = vmatpush1.msra.mxu0 %v25
    %601 = vmatprep.subr.mxu0 %v29
    %602 = vmatpush1.msra.mxu0 %v28
    %603 = vmatprep.subr.mxu0 %v32
    %604 = vmatpush1.msra.mxu0 %v31
    %605 = vmatprep.subr.mxu0 %v35
    %606 = vmatpush1.msra.mxu0 %v34
    %607 = vmatprep.subr.mxu0 %v38
    %608 = vmatpush1.msra.mxu0 %v37
    %609 = vmatprep.subr.mxu0 %v41
    %610 = vmatpush1.msra.mxu0 %v40
    %611 = vmatprep.subr.mxu0 %v44
    %612 = vmatpush1.msra.mxu0 %v43
    %613 = vmatprep.subr.mxu0 %v47
    %614 = vmatpush1.msra.mxu0 %v46
    %615 = vmatprep.subr.mxu0 %v50
    %616 = vmatpush1.msra.mxu0 %v49
    %617 = vmatprep.subr.mxu0 %v53
    %618 = vmatpush1.msra.mxu0 %v52
    %619 = vmatprep.subr.mxu0 %v56
    %620 = vmatpush1.msra.mxu0 %v55
    %621 = vmatprep.subr.mxu0 %v59
    %622 = vmatpush1.msra.mxu0 %v58
    %623 = vmatprep.subr.mxu0 %v62
    %624 = vmatpush1.msra.mxu0 %v61
    %625 = vmatprep.subr.mxu0 %v65
    %626 = vmatpush1.msra.mxu0 %v64
    %627 = vmatprep.subr.mxu0 %v68
    %628 = vmatpush1.msra.mxu0 %v67
    %629 = vmatprep.subr.mxu0 0.0
    %630 = vmatpush1.msra.mxu0 0.0
    %631 = vmatprep.subr.mxu0 0.0
    %632 = vmatpush1.msra.mxu0 0.0
    %633 = vmatprep.subr.mxu0 0.0
    %634 = vmatpush1.msra.mxu0 0.0
    %635 = vmatprep.subr.mxu0 0.0
    %636 = vmatpush1.msra.mxu0 0.0
    %637 = vmatprep.subr.mxu0 0.0
    %638 = vmatpush1.msra.mxu0 0.0
    %639 = vmatprep.subr.mxu0 0.0
    %640 = vmatpush1.msra.mxu0 0.0
    %641 = vmatprep.subr.mxu0 0.0
    %642 = vmatpush1.msra.mxu0 0.0
    %643 = vmatprep.subr.mxu0 0.0
    %644 = vmatpush1.msra.mxu0 0.0
    %645 = vmatprep.subr.mxu0 0.0
    %646 = vmatpush1.msra.mxu0 0.0
    %647 = vmatprep.subr.mxu0 0.0
    %648 = vmatpush1.msra.mxu0 0.0
    %649 = vmatprep.subr.mxu0 0.0
    %650 = vmatpush1.msra.mxu0 0.0
    %651 = vmatprep.subr.mxu0 0.0
    %652 = vmatpush1.msra.mxu0 0.0
    %653 = vmatprep.subr.mxu0 0.0
    %654 = vmatpush1.msra.mxu0 0.0
    %655 = vmatprep.subr.mxu0 0.0
    %656 = vmatpush1.msra.mxu0 0.0
    %657 = vmatprep.subr.mxu0 0.0
    %658 = vmatpush1.msra.mxu0 0.0
    %659 = vmatprep.subr.mxu0 0.0
    %660 = vmatpush1.msra.mxu0 0.0
    %661 = vmatprep.mubr.f32.mxu0 0.0
    %662 = vmatmul.mubr.f32.gmra.mrb[0].mxu0 %v591
    %v663 = vpop.f32.mrb[0].mxu0
    %v664 = vadd.f32 0.0, %v663
    %v665 = vpop.f32.mrb[0].mxu0
    %v666 = vadd.f32 0.0, %v665
    %667 = vdwg.mxu0
    %668 = vmatprep.subr.mxu0 0.0
    %669 = vmatpush1.msra.mxu0 %v24
    %670 = vmatprep.subr.mxu0 0.0
    %671 = vmatpush1.msra.mxu0 %v27
    %672 = vmatprep.subr.mxu0 0.0
    %673 = vmatpush1.msra.mxu0 %v30
    %674 = vmatprep.subr.mxu0 0.0
    %675 = vmatpush1.msra.mxu0 %v33
    %676 = vmatprep.subr.mxu0 0.0
    %677 = vmatpush1.msra.mxu0 %v36
    %678 = vmatprep.subr.mxu0 0.0
    %679 = vmatpush1.msra.mxu0 %v39
    %680 = vmatprep.subr.mxu0 0.0
    %681 = vmatpush1.msra.mxu0 %v42
    %682 = vmatprep.subr.mxu0 0.0
    %683 = vmatpush1.msra.mxu0 %v45
    %684 = vmatprep.subr.mxu0 0.0
    %685 = vmatpush1.msra.mxu0 %v48
    %686 = vmatprep.subr.mxu0 0.0
    %687 = vmatpush1.msra.mxu0 %v51
    %688 = vmatprep.subr.mxu0 0.0
    %689 = vmatpush1.msra.mxu0 %v54
    %690 = vmatprep.subr.mxu0 0.0
    %691 = vmatpush1.msra.mxu0 %v57
    %692 = vmatprep.subr.mxu0 0.0
    %693 = vmatpush1.msra.mxu0 %v60
    %694 = vmatprep.subr.mxu0 0.0
    %695 = vmatpush1.msra.mxu0 %v63
    %696 = vmatprep.subr.mxu0 0.0
    %697 = vmatpush1.msra.mxu0 %v66
    %698 = vmatprep.subr.mxu0 0.0
    %699 = vmatpush1.msra.mxu0 %v69
    %700 = vmatprep.subr.mxu0 0.0
    %701 = vmatpush1.msra.mxu0 0.0
    %702 = vmatprep.subr.mxu0 0.0
    %703 = vmatpush1.msra.mxu0 0.0
    %704 = vmatprep.subr.mxu0 0.0
    %705 = vmatpush1.msra.mxu0 0.0
    %706 = vmatprep.subr.mxu0 0.0
    %707 = vmatpush1.msra.mxu0 0.0
    %708 = vmatprep.subr.mxu0 0.0
    %709 = vmatpush1.msra.mxu0 0.0
    %710 = vmatprep.subr.mxu0 0.0
    %711 = vmatpush1.msra.mxu0 0.0
    %712 = vmatprep.subr.mxu0 0.0
    %713 = vmatpush1.msra.mxu0 0.0
    %714 = vmatprep.subr.mxu0 0.0
    %715 = vmatpush1.msra.mxu0 0.0
    %716 = vmatprep.subr.mxu0 0.0
    %717 = vmatpush1.msra.mxu0 0.0
    %718 = vmatprep.subr.mxu0 0.0
    %719 = vmatpush1.msra.mxu0 0.0
    %720 = vmatprep.subr.mxu0 0.0
    %721 = vmatpush1.msra.mxu0 0.0
    %722 = vmatprep.subr.mxu0 0.0
    %723 = vmatpush1.msra.mxu0 0.0
    %724 = vmatprep.subr.mxu0 0.0
    %725 = vmatpush1.msra.mxu0 0.0
    %726 = vmatprep.subr.mxu0 0.0
    %727 = vmatpush1.msra.mxu0 0.0
    %728 = vmatprep.subr.mxu0 0.0
    %729 = vmatpush1.msra.mxu0 0.0
    %730 = vmatprep.subr.mxu0 0.0
    %731 = vmatpush1.msra.mxu0 0.0
    %732 = vmatprep.mubr.f32.mxu0 0.0
    %733 = vmatmul.mubr.f32.gmra.mrb[0].mxu0 %v591
    %v734 = vpop.f32.mrb[0].mxu0
    %v735 = vadd.f32 0.0, %v734
    %v736 = vpop.f32.mrb[0].mxu0
    %737 = vdwg.mxu0
    %v738 = vadd.f32 %v596, %v664
    %v739 = vxor.u32 %v738, 2147483648
    %v740 = vmul.f32 %v739, 1.442695
    %v741 = vpow.pop %v740
    %v742 = vadd.f32 %v741, 1.0
    %v743 = vrcp.pop %v742
    %v744 = vmul.f32 1.0, %v743
    %v746 = vrot.slane %v596, 2
    %v748 = vadd.f32 %v746, %v666
    %v749 = vxor.u32 %v748, 2147483648
    %v750 = vmul.f32 %v749, 1.442695
    %v751 = vpow.pop %v750
    %v752 = vadd.f32 %v751, 1.0
    %v753 = vrcp.pop %v752
    %v754 = vmul.f32 1.0, %v753
    %v755 = vadd.f32 %v735, %v235
    %v756 = vmul.f32 %v744, %v755
    %v757 = vrot.slane %v596, 4
    %v759 = vadd.f32 %v757, %v756
    %v760 = vtanh.pop %v759
    %v761 = vsub.f32 1.0, %v754
    %v762 = vmul.f32 %v761, %v760
    %v763 = vmul.f32 %v754, %v591
    %v764 = vadd.f32 %v762, %v763
    %v765 = vmax.f32 %v764, 0.0
    %s766 = scalar_lea.vmem %s3, 6
    %767 = vst [vmem:[%s766] sm:$0x3] %v765
    %s768 = scalar_lea.vmem %s0, 24
    %v769 = vld [vmem:[%s768] sm:$0x3f]
    %770 = vmatprep.subr.mxu0 %v23
    %771 = vmatpush1.msra.mxu0 %v22
    %772 = vmatprep.subr.mxu0 %v26
    %773 = vmatpush1.msra.mxu0 %v25
    %774 = vmatprep.subr.mxu0 %v29
    %775 = vmatpush1.msra.mxu0 %v28
    %776 = vmatprep.subr.mxu0 %v32
    %777 = vmatpush1.msra.mxu0 %v31
    %778 = vmatprep.subr.mxu0 %v35
    %779 = vmatpush1.msra.mxu0 %v34
    %780 = vmatprep.subr.mxu0 %v38
    %781 = vmatpush1.msra.mxu0 %v37
    %782 = vmatprep.subr.mxu0 %v41
    %783 = vmatpush1.msra.mxu0 %v40
    %784 = vmatprep.subr.mxu0 %v44
    %785 = vmatpush1.msra.mxu0 %v43
    %786 = vmatprep.subr.mxu0 %v47
    %787 = vmatpush1.msra.mxu0 %v46
    %788 = vmatprep.subr.mxu0 %v50
    %789 = vmatpush1.msra.mxu0 %v49
    %790 = vmatprep.subr.mxu0 %v53
    %791 = vmatpush1.msra.mxu0 %v52
    %792 = vmatprep.subr.mxu0 %v56
    %793 = vmatpush1.msra.mxu0 %v55
    %794 = vmatprep.subr.mxu0 %v59
    %795 = vmatpush1.msra.mxu0 %v58
    %796 = vmatprep.subr.mxu0 %v62
    %797 = vmatpush1.msra.mxu0 %v61
    %798 = vmatprep.subr.mxu0 %v65
    %799 = vmatpush1.msra.mxu0 %v64
    %800 = vmatprep.subr.mxu0 %v68
    %801 = vmatpush1.msra.mxu0 %v67
    %802 = vmatprep.subr.mxu0 0.0
    %803 = vmatpush1.msra.mxu0 0.0
    %804 = vmatprep.subr.mxu0 0.0
    %805 = vmatpush1.msra.mxu0 0.0
    %806 = vmatprep.subr.mxu0 0.0
    %807 = vmatpush1.msra.mxu0 0.0
    %808 = vmatprep.subr.mxu0 0.0
    %809 = vmatpush1.msra.mxu0 0.0
    %810 = vmatprep.subr.mxu0 0.0
    %811 = vmatpush1.msra.mxu0 0.0
    %812 = vmatprep.subr.mxu0 0.0
    %813 = vmatpush1.msra.mxu0 0.0
    %814 = vmatprep.subr.mxu0 0.0
    %815 = vmatpush1.msra.mxu0 0.0
    %816 = vmatprep.subr.mxu0 0.0
    %817 = vmatpush1.msra.mxu0 0.0
    %818 = vmatprep.subr.mxu0 0.0
    %819 = vmatpush1.msra.mxu0 0.0
    %820 = vmatprep.subr.mxu0 0.0
    %821 = vmatpush1.msra.mxu0 0.0
    %822 = vmatprep.subr.mxu0 0.0
    %823 = vmatpush1.msra.mxu0 0.0
    %824 = vmatprep.subr.mxu0 0.0
    %825 = vmatpush1.msra.mxu0 0.0
    %826 = vmatprep.subr.mxu0 0.0
    %827 = vmatpush1.msra.mxu0 0.0
    %828 = vmatprep.subr.mxu0 0.0
    %829 = vmatpush1.msra.mxu0 0.0
    %830 = vmatprep.subr.mxu0 0.0
    %831 = vmatpush1.msra.mxu0 0.0
    %832 = vmatprep.subr.mxu0 0.0
    %833 = vmatpush1.msra.mxu0 0.0
    %834 = vmatprep.mubr.f32.mxu0 0.0
    %835 = vmatmul.mubr.f32.gmra.mrb[0].mxu0 %v764
    %v836 = vpop.f32.mrb[0].mxu0
    %v837 = vadd.f32 0.0, %v836
    %v838 = vpop.f32.mrb[0].mxu0
    %v839 = vadd.f32 0.0, %v838
    %840 = vdwg.mxu0
    %841 = vmatprep.subr.mxu0 0.0
    %842 = vmatpush1.msra.mxu0 %v24
    %843 = vmatprep.subr.mxu0 0.0
    %844 = vmatpush1.msra.mxu0 %v27
    %845 = vmatprep.subr.mxu0 0.0
    %846 = vmatpush1.msra.mxu0 %v30
    %847 = vmatprep.subr.mxu0 0.0
    %848 = vmatpush1.msra.mxu0 %v33
    %849 = vmatprep.subr.mxu0 0.0
    %850 = vmatpush1.msra.mxu0 %v36
    %851 = vmatprep.subr.mxu0 0.0
    %852 = vmatpush1.msra.mxu0 %v39
    %853 = vmatprep.subr.mxu0 0.0
    %854 = vmatpush1.msra.mxu0 %v42
    %855 = vmatprep.subr.mxu0 0.0
    %856 = vmatpush1.msra.mxu0 %v45
    %857 = vmatprep.subr.mxu0 0.0
    %858 = vmatpush1.msra.mxu0 %v48
    %859 = vmatprep.subr.mxu0 0.0
    %860 = vmatpush1.msra.mxu0 %v51
    %861 = vmatprep.subr.mxu0 0.0
    %862 = vmatpush1.msra.mxu0 %v54
    %863 = vmatprep.subr.mxu0 0.0
    %864 = vmatpush1.msra.mxu0 %v57
    %865 = vmatprep.subr.mxu0 0.0
    %866 = vmatpush1.msra.mxu0 %v60
    %867 = vmatprep.subr.mxu0 0.0
    %868 = vmatpush1.msra.mxu0 %v63
    %869 = vmatprep.subr.mxu0 0.0
    %870 = vmatpush1.msra.mxu0 %v66
    %871 = vmatprep.subr.mxu0 0.0
    %872 = vmatpush1.msra.mxu0 %v69
    %873 = vmatprep.subr.mxu0 0.0
    %874 = vmatpush1.msra.mxu0 0.0
    %875 = vmatprep.subr.mxu0 0.0
    %876 = vmatpush1.msra.mxu0 0.0
    %877 = vmatprep.subr.mxu0 0.0
    %878 = vmatpush1.msra.mxu0 0.0
    %879 = vmatprep.subr.mxu0 0.0
    %880 = vmatpush1.msra.mxu0 0.0
    %881 = vmatprep.subr.mxu0 0.0
    %882 = vmatpush1.msra.mxu0 0.0
    %883 = vmatprep.subr.mxu0 0.0
    %884 = vmatpush1.msra.mxu0 0.0
    %885 = vmatprep.subr.mxu0 0.0
    %886 = vmatpush1.msra.mxu0 0.0
    %887 = vmatprep.subr.mxu0 0.0
    %888 = vmatpush1.msra.mxu0 0.0
    %889 = vmatprep.subr.mxu0 0.0
    %890 = vmatpush1.msra.mxu0 0.0
    %891 = vmatprep.subr.mxu0 0.0
    %892 = vmatpush1.msra.mxu0 0.0
    %893 = vmatprep.subr.mxu0 0.0
    %894 = vmatpush1.msra.mxu0 0.0
    %895 = vmatprep.subr.mxu0 0.0
    %896 = vmatpush1.msra.mxu0 0.0
    %897 = vmatprep.subr.mxu0 0.0
    %898 = vmatpush1.msra.mxu0 0.0
    %899 = vmatprep.subr.mxu0 0.0
    %900 = vmatpush1.msra.mxu0 0.0
    %901 = vmatprep.subr.mxu0 0.0
    %902 = vmatpush1.msra.mxu0 0.0
    %903 = vmatprep.subr.mxu0 0.0
    %904 = vmatpush1.msra.mxu0 0.0
    %905 = vmatprep.mubr.f32.mxu0 0.0
    %906 = vmatmul.mubr.f32.gmra.mrb[0].mxu0 %v764
    %v907 = vpop.f32.mrb[0].mxu0
    %v908 = vadd.f32 0.0, %v907
    %v909 = vpop.f32.mrb[0].mxu0
    %910 = vdwg.mxu0
    %v911 = vadd.f32 %v769, %v837
    %v912 = vxor.u32 %v911, 2147483648
    %v913 = vmul.f32 %v912, 1.442695
    %v914 = vpow.pop %v913
    %v915 = vadd.f32 %v914, 1.0
    %v916 = vrcp.pop %v915
    %v917 = vmul.f32 1.0, %v916
    %v919 = vrot.slane %v769, 2
    %v921 = vadd.f32 %v919, %v839
    %v922 = vxor.u32 %v921, 2147483648
    %v923 = vmul.f32 %v922, 1.442695
    %v924 = vpow.pop %v923
    %v925 = vadd.f32 %v924, 1.0
    %v926 = vrcp.pop %v925
    %v927 = vmul.f32 1.0, %v926
    %v928 = vadd.f32 %v908, %v235
    %v929 = vmul.f32 %v917, %v928
    %v930 = vrot.slane %v769, 4
    %v932 = vadd.f32 %v930, %v929
    %v933 = vtanh.pop %v932
    %v934 = vsub.f32 1.0, %v927
    %v935 = vmul.f32 %v934, %v933
    %v936 = vmul.f32 %v927, %v764
    %v937 = vadd.f32 %v935, %v936
    %v938 = vmax.f32 %v937, 0.0
    %s939 = scalar_lea.vmem %s3, 8
    %940 = vst [vmem:[%s939] sm:$0x3] %v938
    %s941 = scalar_lea.vmem %s0, 30
    %v942 = vld [vmem:[%s941] sm:$0x3f]
    %943 = vmatprep.subr.mxu0 %v23
    %944 = vmatpush1.msra.mxu0 %v22
    %945 = vmatprep.subr.mxu0 %v26
    %946 = vmatpush1.msra.mxu0 %v25
    %947 = vmatprep.subr.mxu0 %v29
    %948 = vmatpush1.msra.mxu0 %v28
    %949 = vmatprep.subr.mxu0 %v32
    %950 = vmatpush1.msra.mxu0 %v31
    %951 = vmatprep.subr.mxu0 %v35
    %952 = vmatpush1.msra.mxu0 %v34
    %953 = vmatprep.subr.mxu0 %v38
    %954 = vmatpush1.msra.mxu0 %v37
    %955 = vmatprep.subr.mxu0 %v41
    %956 = vmatpush1.msra.mxu0 %v40
    %957 = vmatprep.subr.mxu0 %v44
    %958 = vmatpush1.msra.mxu0 %v43
    %959 = vmatprep.subr.mxu0 %v47
    %960 = vmatpush1.msra.mxu0 %v46
    %961 = vmatprep.subr.mxu0 %v50
    %962 = vmatpush1.msra.mxu0 %v49
    %963 = vmatprep.subr.mxu0 %v53
    %964 = vmatpush1.msra.mxu0 %v52
    %965 = vmatprep.subr.mxu0 %v56
    %966 = vmatpush1.msra.mxu0 %v55
    %967 = vmatprep.subr.mxu0 %v59
    %968 = vmatpush1.msra.mxu0 %v58
    %969 = vmatprep.subr.mxu0 %v62
    %970 = vmatpush1.msra.mxu0 %v61
    %971 = vmatprep.subr.mxu0 %v65
    %972 = vmatpush1.msra.mxu0 %v64
    %973 = vmatprep.subr.mxu0 %v68
    %974 = vmatpush1.msra.mxu0 %v67
    %975 = vmatprep.subr.mxu0 0.0
    %976 = vmatpush1.msra.mxu0 0.0
    %977 = vmatprep.subr.mxu0 0.0
    %978 = vmatpush1.msra.mxu0 0.0
    %979 = vmatprep.subr.mxu0 0.0
    %980 = vmatpush1.msra.mxu0 0.0
    %981 = vmatprep.subr.mxu0 0.0
    %982 = vmatpush1.msra.mxu0 0.0
    %983 = vmatprep.subr.mxu0 0.0
    %984 = vmatpush1.msra.mxu0 0.0
    %985 = vmatprep.subr.mxu0 0.0
    %986 = vmatpush1.msra.mxu0 0.0
    %987 = vmatprep.subr.mxu0 0.0
    %988 = vmatpush1.msra.mxu0 0.0
    %989 = vmatprep.subr.mxu0 0.0
    %990 = vmatpush1.msra.mxu0 0.0
    %991 = vmatprep.subr.mxu0 0.0
    %992 = vmatpush1.msra.mxu0 0.0
    %993 = vmatprep.subr.mxu0 0.0
    %994 = vmatpush1.msra.mxu0 0.0
    %995 = vmatprep.subr.mxu0 0.0
    %996 = vmatpush1.msra.mxu0 0.0
    %997 = vmatprep.subr.mxu0 0.0
    %998 = vmatpush1.msra.mxu0 0.0
    %999 = vmatprep.subr.mxu0 0.0
    %1000 = vmatpush1.msra.mxu0 0.0
    %1001 = vmatprep.subr.mxu0 0.0
    %1002 = vmatpush1.msra.mxu0 0.0
    %1003 = vmatprep.subr.mxu0 0.0
    %1004 = vmatpush1.msra.mxu0 0.0
    %1005 = vmatprep.subr.mxu0 0.0
    %1006 = vmatpush1.msra.mxu0 0.0
    %1007 = vmatprep.mubr.f32.mxu0 0.0
    %1008 = vmatmul.mubr.f32.gmra.mrb[0].mxu0 %v937
    %v1009 = vpop.f32.mrb[0].mxu0
    %v1010 = vadd.f32 0.0, %v1009
    %v1011 = vpop.f32.mrb[0].mxu0
    %v1012 = vadd.f32 0.0, %v1011
    %1013 = vdwg.mxu0
    %1014 = vmatprep.subr.mxu0 0.0
    %1015 = vmatpush1.msra.mxu0 %v24
    %1016 = vmatprep.subr.mxu0 0.0
    %1017 = vmatpush1.msra.mxu0 %v27
    %1018 = vmatprep.subr.mxu0 0.0
    %1019 = vmatpush1.msra.mxu0 %v30
    %1020 = vmatprep.subr.mxu0 0.0
    %1021 = vmatpush1.msra.mxu0 %v33
    %1022 = vmatprep.subr.mxu0 0.0
    %1023 = vmatpush1.msra.mxu0 %v36
    %1024 = vmatprep.subr.mxu0 0.0
    %1025 = vmatpush1.msra.mxu0 %v39
    %1026 = vmatprep.subr.mxu0 0.0
    %1027 = vmatpush1.msra.mxu0 %v42
    %1028 = vmatprep.subr.mxu0 0.0
    %1029 = vmatpush1.msra.mxu0 %v45
    %1030 = vmatprep.subr.mxu0 0.0
    %1031 = vmatpush1.msra.mxu0 %v48
    %1032 = vmatprep.subr.mxu0 0.0
    %1033 = vmatpush1.msra.mxu0 %v51
    %1034 = vmatprep.subr.mxu0 0.0
    %1035 = vmatpush1.msra.mxu0 %v54
    %1036 = vmatprep.subr.mxu0 0.0
    %1037 = vmatpush1.msra.mxu0 %v57
    %1038 = vmatprep.subr.mxu0 0.0
    %1039 = vmatpush1.msra.mxu0 %v60
    %1040 = vmatprep.subr.mxu0 0.0
    %1041 = vmatpush1.msra.mxu0 %v63
    %1042 = vmatprep.subr.mxu0 0.0
    %1043 = vmatpush1.msra.mxu0 %v66
    %1044 = vmatprep.subr.mxu0 0.0
    %1045 = vmatpush1.msra.mxu0 %v69
    %1046 = vmatprep.subr.mxu0 0.0
    %1047 = vmatpush1.msra.mxu0 0.0
    %1048 = vmatprep.subr.mxu0 0.0
    %1049 = vmatpush1.msra.mxu0 0.0
    %1050 = vmatprep.subr.mxu0 0.0
    %1051 = vmatpush1.msra.mxu0 0.0
    %1052 = vmatprep.subr.mxu0 0.0
    %1053 = vmatpush1.msra.mxu0 0.0
    %1054 = vmatprep.subr.mxu0 0.0
    %1055 = vmatpush1.msra.mxu0 0.0
    %1056 = vmatprep.subr.mxu0 0.0
    %1057 = vmatpush1.msra.mxu0 0.0
    %1058 = vmatprep.subr.mxu0 0.0
    %1059 = vmatpush1.msra.mxu0 0.0
    %1060 = vmatprep.subr.mxu0 0.0
    %1061 = vmatpush1.msra.mxu0 0.0
    %1062 = vmatprep.subr.mxu0 0.0
    %1063 = vmatpush1.msra.mxu0 0.0
    %1064 = vmatprep.subr.mxu0 0.0
    %1065 = vmatpush1.msra.mxu0 0.0
    %1066 = vmatprep.subr.mxu0 0.0
    %1067 = vmatpush1.msra.mxu0 0.0
    %1068 = vmatprep.subr.mxu0 0.0
    %1069 = vmatpush1.msra.mxu0 0.0
    %1070 = vmatprep.subr.mxu0 0.0
    %1071 = vmatpush1.msra.mxu0 0.0
    %1072 = vmatprep.subr.mxu0 0.0
    %1073 = vmatpush1.msra.mxu0 0.0
    %1074 = vmatprep.subr.mxu0 0.0
    %1075 = vmatpush1.msra.mxu0 0.0
    %1076 = vmatprep.subr.mxu0 0.0
    %1077 = vmatpush1.msra.mxu0 0.0
    %1078 = vmatprep.mubr.f32.mxu0 0.0
    %1079 = vmatmul.mubr.f32.gmra.mrb[0].mxu0 %v937
    %v1080 = vpop.f32.mrb[0].mxu0
    %v1081 = vadd.f32 0.0, %v1080
    %v1082 = vpop.f32.mrb[0].mxu0
    %1083 = vdwg.mxu0
    %v1084 = vadd.f32 %v942, %v1010
    %v1085 = vxor.u32 %v1084, 2147483648
    %v1086 = vmul.f32 %v1085, 1.442695
    %v1087 = vpow.pop %v1086
    %v1088 = vadd.f32 %v1087, 1.0
    %v1089 = vrcp.pop %v1088
    %v1090 = vmul.f32 1.0, %v1089
    %v1092 = vrot.slane %v942, 2
    %v1094 = vadd.f32 %v1092, %v1012
    %v1095 = vxor.u32 %v1094, 2147483648
    %v1096 = vmul.f32 %v1095, 1.442695
    %v1097 = vpow.pop %v1096
    %v1098 = vadd.f32 %v1097, 1.0
    %v1099 = vrcp.pop %v1098
    %v1100 = vmul.f32 1.0, %v1099
    %v1101 = vadd.f32 %v1081, %v235
    %v1102 = vmul.f32 %v1090, %v1101
    %v1103 = vrot.slane %v942, 4
    %v1105 = vadd.f32 %v1103, %v1102
    %v1106 = vtanh.pop %v1105
    %v1107 = vsub.f32 1.0, %v1100
    %v1108 = vmul.f32 %v1107, %v1106
    %v1109 = vmul.f32 %v1100, %v937
    %v1110 = vadd.f32 %v1108, %v1109
    %v1111 = vmax.f32 %v1110, 0.0
    %s1112 = scalar_lea.vmem %s3, 10
    %1113 = vst [vmem:[%s1112] sm:$0x3] %v1111
    %s1114 = scalar_lea.vmem %s0, 36
    %v1115 = vld [vmem:[%s1114] sm:$0x3f]
    %1116 = vmatprep.subr.mxu0 %v23
    %1117 = vmatpush1.msra.mxu0 %v22
    %1118 = vmatprep.subr.mxu0 %v26
    %1119 = vmatpush1.msra.mxu0 %v25
    %1120 = vmatprep.subr.mxu0 %v29
    %1121 = vmatpush1.msra.mxu0 %v28
    %1122 = vmatprep.subr.mxu0 %v32
    %1123 = vmatpush1.msra.mxu0 %v31
    %1124 = vmatprep.subr.mxu0 %v35
    %1125 = vmatpush1.msra.mxu0 %v34
    %1126 = vmatprep.subr.mxu0 %v38
    %1127 = vmatpush1.msra.mxu0 %v37
    %1128 = vmatprep.subr.mxu0 %v41
    %1129 = vmatpush1.msra.mxu0 %v40
    %1130 = vmatprep.subr.mxu0 %v44
    %1131 = vmatpush1.msra.mxu0 %v43
    %1132 = vmatprep.subr.mxu0 %v47
    %1133 = vmatpush1.msra.mxu0 %v46
    %1134 = vmatprep.subr.mxu0 %v50
    %1135 = vmatpush1.msra.mxu0 %v49
    %1136 = vmatprep.subr.mxu0 %v53
    %1137 = vmatpush1.msra.mxu0 %v52
    %1138 = vmatprep.subr.mxu0 %v56
    %1139 = vmatpush1.msra.mxu0 %v55
    %1140 = vmatprep.subr.mxu0 %v59
    %1141 = vmatpush1.msra.mxu0 %v58
    %1142 = vmatprep.subr.mxu0 %v62
    %1143 = vmatpush1.msra.mxu0 %v61
    %1144 = vmatprep.subr.mxu0 %v65
    %1145 = vmatpush1.msra.mxu0 %v64
    %1146 = vmatprep.subr.mxu0 %v68
    %1147 = vmatpush1.msra.mxu0 %v67
    %1148 = vmatprep.subr.mxu0 0.0
    %1149 = vmatpush1.msra.mxu0 0.0
    %1150 = vmatprep.subr.mxu0 0.0
    %1151 = vmatpush1.msra.mxu0 0.0
    %1152 = vmatprep.subr.mxu0 0.0
    %1153 = vmatpush1.msra.mxu0 0.0
    %1154 = vmatprep.subr.mxu0 0.0
    %1155 = vmatpush1.msra.mxu0 0.0
    %1156 = vmatprep.subr.mxu0 0.0
    %1157 = vmatpush1.msra.mxu0 0.0
    %1158 = vmatprep.subr.mxu0 0.0
    %1159 = vmatpush1.msra.mxu0 0.0
    %1160 = vmatprep.subr.mxu0 0.0
    %1161 = vmatpush1.msra.mxu0 0.0
    %1162 = vmatprep.subr.mxu0 0.0
    %1163 = vmatpush1.msra.mxu0 0.0
    %1164 = vmatprep.subr.mxu0 0.0
    %1165 = vmatpush1.msra.mxu0 0.0
    %1166 = vmatprep.subr.mxu0 0.0
    %1167 = vmatpush1.msra.mxu0 0.0
    %1168 = vmatprep.subr.mxu0 0.0
    %1169 = vmatpush1.msra.mxu0 0.0
    %1170 = vmatprep.subr.mxu0 0.0
    %1171 = vmatpush1.msra.mxu0 0.0
    %1172 = vmatprep.subr.mxu0 0.0
    %1173 = vmatpush1.msra.mxu0 0.0
    %1174 = vmatprep.subr.mxu0 0.0
    %1175 = vmatpush1.msra.mxu0 0.0
    %1176 = vmatprep.subr.mxu0 0.0
    %1177 = vmatpush1.msra.mxu0 0.0
    %1178 = vmatprep.subr.mxu0 0.0
    %1179 = vmatpush1.msra.mxu0 0.0
    %1180 = vmatprep.mubr.f32.mxu0 0.0
    %1181 = vmatmul.mubr.f32.gmra.mrb[0].mxu0 %v1110
    %v1182 = vpop.f32.mrb[0].mxu0
    %v1183 = vadd.f32 0.0, %v1182
    %v1184 = vpop.f32.mrb[0].mxu0
    %v1185 = vadd.f32 0.0, %v1184
    %1186 = vdwg.mxu0
    %1187 = vmatprep.subr.mxu0 0.0
    %1188 = vmatpush1.msra.mxu0 %v24
    %1189 = vmatprep.subr.mxu0 0.0
    %1190 = vmatpush1.msra.mxu0 %v27
    %1191 = vmatprep.subr.mxu0 0.0
    %1192 = vmatpush1.msra.mxu0 %v30
    %1193 = vmatprep.subr.mxu0 0.0
    %1194 = vmatpush1.msra.mxu0 %v33
    %1195 = vmatprep.subr.mxu0 0.0
    %1196 = vmatpush1.msra.mxu0 %v36
    %1197 = vmatprep.subr.mxu0 0.0
    %1198 = vmatpush1.msra.mxu0 %v39
    %1199 = vmatprep.subr.mxu0 0.0
    %1200 = vmatpush1.msra.mxu0 %v42
    %1201 = vmatprep.subr.mxu0 0.0
    %1202 = vmatpush1.msra.mxu0 %v45
    %1203 = vmatprep.subr.mxu0 0.0
    %1204 = vmatpush1.msra.mxu0 %v48
    %1205 = vmatprep.subr.mxu0 0.0
    %1206 = vmatpush1.msra.mxu0 %v51
    %1207 = vmatprep.subr.mxu0 0.0
    %1208 = vmatpush1.msra.mxu0 %v54
    %1209 = vmatprep.subr.mxu0 0.0
    %1210 = vmatpush1.msra.mxu0 %v57
    %1211 = vmatprep.subr.mxu0 0.0
    %1212 = vmatpush1.msra.mxu0 %v60
    %1213 = vmatprep.subr.mxu0 0.0
    %1214 = vmatpush1.msra.mxu0 %v63
    %1215 = vmatprep.subr.mxu0 0.0
    %1216 = vmatpush1.msra.mxu0 %v66
    %1217 = vmatprep.subr.mxu0 0.0
    %1218 = vmatpush1.msra.mxu0 %v69
    %1219 = vmatprep.subr.mxu0 0.0
    %1220 = vmatpush1.msra.mxu0 0.0
    %1221 = vmatprep.subr.mxu0 0.0
    %1222 = vmatpush1.msra.mxu0 0.0
    %1223 = vmatprep.subr.mxu0 0.0
    %1224 = vmatpush1.msra.mxu0 0.0
    %1225 = vmatprep.subr.mxu0 0.0
    %1226 = vmatpush1.msra.mxu0 0.0
    %1227 = vmatprep.subr.mxu0 0.0
    %1228 = vmatpush1.msra.mxu0 0.0
    %1229 = vmatprep.subr.mxu0 0.0
    %1230 = vmatpush1.msra.mxu0 0.0
    %1231 = vmatprep.subr.mxu0 0.0
    %1232 = vmatpush1.msra.mxu0 0.0
    %1233 = vmatprep.subr.mxu0 0.0
    %1234 = vmatpush1.msra.mxu0 0.0
    %1235 = vmatprep.subr.mxu0 0.0
    %1236 = vmatpush1.msra.mxu0 0.0
    %1237 = vmatprep.subr.mxu0 0.0
    %1238 = vmatpush1.msra.mxu0 0.0
    %1239 = vmatprep.subr.mxu0 0.0
    %1240 = vmatpush1.msra.mxu0 0.0
    %1241 = vmatprep.subr.mxu0 0.0
    %1242 = vmatpush1.msra.mxu0 0.0
    %1243 = vmatprep.subr.mxu0 0.0
    %1244 = vmatpush1.msra.mxu0 0.0
    %1245 = vmatprep.subr.mxu0 0.0
    %1246 = vmatpush1.msra.mxu0 0.0
    %1247 = vmatprep.subr.mxu0 0.0
    %1248 = vmatpush1.msra.mxu0 0.0
    %1249 = vmatprep.subr.mxu0 0.0
    %1250 = vmatpush1.msra.mxu0 0.0
    %1251 = vmatprep.mubr.f32.mxu0 0.0
    %1252 = vmatmul.mubr.f32.gmra.mrb[0].mxu0 %v1110
    %v1253 = vpop.f32.mrb[0].mxu0
    %v1254 = vadd.f32 0.0, %v1253
    %v1255 = vpop.f32.mrb[0].mxu0
    %1256 = vdwg.mxu0
    %v1257 = vadd.f32 %v1115, %v1183
    %v1258 = vxor.u32 %v1257, 2147483648
    %v1259 = vmul.f32 %v1258, 1.442695
    %v1260 = vpow.pop %v1259
    %v1261 = vadd.f32 %v1260, 1.0
    %v1262 = vrcp.pop %v1261
    %v1263 = vmul.f32 1.0, %v1262
    %v1265 = vrot.slane %v1115, 2
    %v1267 = vadd.f32 %v1265, %v1185
    %v1268 = vxor.u32 %v1267, 2147483648
    %v1269 = vmul.f32 %v1268, 1.442695
    %v1270 = vpow.pop %v1269
    %v1271 = vadd.f32 %v1270, 1.0
    %v1272 = vrcp.pop %v1271
    %v1273 = vmul.f32 1.0, %v1272
    %v1274 = vadd.f32 %v1254, %v235
    %v1275 = vmul.f32 %v1263, %v1274
    %v1276 = vrot.slane %v1115, 4
    %v1278 = vadd.f32 %v1276, %v1275
    %v1279 = vtanh.pop %v1278
    %v1280 = vsub.f32 1.0, %v1273
    %v1281 = vmul.f32 %v1280, %v1279
    %v1282 = vmul.f32 %v1273, %v1110
    %v1283 = vadd.f32 %v1281, %v1282
    %v1284 = vmax.f32 %v1283, 0.0
    %s1285 = scalar_lea.vmem %s3, 12
    %1286 = vst [vmem:[%s1285] sm:$0x3] %v1284
    %s1287 = scalar_lea.vmem %s0, 42
    %v1288 = vld [vmem:[%s1287] sm:$0x3f]
    %1289 = vmatprep.subr.mxu0 %v23
    %1290 = vmatpush1.msra.mxu0 %v22
    %1291 = vmatprep.subr.mxu0 %v26
    %1292 = vmatpush1.msra.mxu0 %v25
    %1293 = vmatprep.subr.mxu0 %v29
    %1294 = vmatpush1.msra.mxu0 %v28
    %1295 = vmatprep.subr.mxu0 %v32
    %1296 = vmatpush1.msra.mxu0 %v31
    %1297 = vmatprep.subr.mxu0 %v35
    %1298 = vmatpush1.msra.mxu0 %v34
    %1299 = vmatprep.subr.mxu0 %v38
    %1300 = vmatpush1.msra.mxu0 %v37
    %1301 = vmatprep.subr.mxu0 %v41
    %1302 = vmatpush1.msra.mxu0 %v40
    %1303 = vmatprep.subr.mxu0 %v44
    %1304 = vmatpush1.msra.mxu0 %v43
    %1305 = vmatprep.subr.mxu0 %v47
    %1306 = vmatpush1.msra.mxu0 %v46
    %1307 = vmatprep.subr.mxu0 %v50
    %1308 = vmatpush1.msra.mxu0 %v49
    %1309 = vmatprep.subr.mxu0 %v53
    %1310 = vmatpush1.msra.mxu0 %v52
    %1311 = vmatprep.subr.mxu0 %v56
    %1312 = vmatpush1.msra.mxu0 %v55
    %1313 = vmatprep.subr.mxu0 %v59
    %1314 = vmatpush1.msra.mxu0 %v58
    %1315 = vmatprep.subr.mxu0 %v62
    %1316 = vmatpush1.msra.mxu0 %v61
    %1317 = vmatprep.subr.mxu0 %v65
    %1318 = vmatpush1.msra.mxu0 %v64
    %1319 = vmatprep.subr.mxu0 %v68
    %1320 = vmatpush1.msra.mxu0 %v67
    %1321 = vmatprep.subr.mxu0 0.0
    %1322 = vmatpush1.msra.mxu0 0.0
    %1323 = vmatprep.subr.mxu0 0.0
    %1324 = vmatpush1.msra.mxu0 0.0
    %1325 = vmatprep.subr.mxu0 0.0
    %1326 = vmatpush1.msra.mxu0 0.0
    %1327 = vmatprep.subr.mxu0 0.0
    %1328 = vmatpush1.msra.mxu0 0.0
    %1329 = vmatprep.subr.mxu0 0.0
    %1330 = vmatpush1.msra.mxu0 0.0
    %1331 = vmatprep.subr.mxu0 0.0
    %1332 = vmatpush1.msra.mxu0 0.0
    %1333 = vmatprep.subr.mxu0 0.0
    %1334 = vmatpush1.msra.mxu0 0.0
    %1335 = vmatprep.subr.mxu0 0.0
    %1336 = vmatpush1.msra.mxu0 0.0
    %1337 = vmatprep.subr.mxu0 0.0
    %1338 = vmatpush1.msra.mxu0 0.0
    %1339 = vmatprep.subr.mxu0 0.0
    %1340 = vmatpush1.msra.mxu0 0.0
    %1341 = vmatprep.subr.mxu0 0.0
    %1342 = vmatpush1.msra.mxu0 0.0
    %1343 = vmatprep.subr.mxu0 0.0
    %1344 = vmatpush1.msra.mxu0 0.0
    %1345 = vmatprep.subr.mxu0 0.0
    %1346 = vmatpush1.msra.mxu0 0.0
    %1347 = vmatprep.subr.mxu0 0.0
    %1348 = vmatpush1.msra.mxu0 0.0
    %1349 = vmatprep.subr.mxu0 0.0
    %1350 = vmatpush1.msra.mxu0 0.0
    %1351 = vmatprep.subr.mxu0 0.0
    %1352 = vmatpush1.msra.mxu0 0.0
    %1353 = vmatprep.mubr.f32.mxu0 0.0
    %1354 = vmatmul.mubr.f32.gmra.mrb[0].mxu0 %v1283
    %v1355 = vpop.f32.mrb[0].mxu0
    %v1356 = vadd.f32 0.0, %v1355
    %v1357 = vpop.f32.mrb[0].mxu0
    %v1358 = vadd.f32 0.0, %v1357
    %1359 = vdwg.mxu0
    %1360 = vmatprep.subr.mxu0 0.0
    %1361 = vmatpush1.msra.mxu0 %v24
    %1362 = vmatprep.subr.mxu0 0.0
    %1363 = vmatpush1.msra.mxu0 %v27
    %1364 = vmatprep.subr.mxu0 0.0
    %1365 = vmatpush1.msra.mxu0 %v30
    %1366 = vmatprep.subr.mxu0 0.0
    %1367 = vmatpush1.msra.mxu0 %v33
    %1368 = vmatprep.subr.mxu0 0.0
    %1369 = vmatpush1.msra.mxu0 %v36
    %1370 = vmatprep.subr.mxu0 0.0
    %1371 = vmatpush1.msra.mxu0 %v39
    %1372 = vmatprep.subr.mxu0 0.0
    %1373 = vmatpush1.msra.mxu0 %v42
    %1374 = vmatprep.subr.mxu0 0.0
    %1375 = vmatpush1.msra.mxu0 %v45
    %1376 = vmatprep.subr.mxu0 0.0
    %1377 = vmatpush1.msra.mxu0 %v48
    %1378 = vmatprep.subr.mxu0 0.0
    %1379 = vmatpush1.msra.mxu0 %v51
    %1380 = vmatprep.subr.mxu0 0.0
    %1381 = vmatpush1.msra.mxu0 %v54
    %1382 = vmatprep.subr.mxu0 0.0
    %1383 = vmatpush1.msra.mxu0 %v57
    %1384 = vmatprep.subr.mxu0 0.0
    %1385 = vmatpush1.msra.mxu0 %v60
    %1386 = vmatprep.subr.mxu0 0.0
    %1387 = vmatpush1.msra.mxu0 %v63
    %1388 = vmatprep.subr.mxu0 0.0
    %1389 = vmatpush1.msra.mxu0 %v66
    %1390 = vmatprep.subr.mxu0 0.0
    %1391 = vmatpush1.msra.mxu0 %v69
    %1392 = vmatprep.subr.mxu0 0.0
    %1393 = vmatpush1.msra.mxu0 0.0
    %1394 = vmatprep.subr.mxu0 0.0
    %1395 = vmatpush1.msra.mxu0 0.0
    %1396 = vmatprep.subr.mxu0 0.0
    %1397 = vmatpush1.msra.mxu0 0.0
    %1398 = vmatprep.subr.mxu0 0.0
    %1399 = vmatpush1.msra.mxu0 0.0
    %1400 = vmatprep.subr.mxu0 0.0
    %1401 = vmatpush1.msra.mxu0 0.0
    %1402 = vmatprep.subr.mxu0 0.0
    %1403 = vmatpush1.msra.mxu0 0.0
    %1404 = vmatprep.subr.mxu0 0.0
    %1405 = vmatpush1.msra.mxu0 0.0
    %1406 = vmatprep.subr.mxu0 0.0
    %1407 = vmatpush1.msra.mxu0 0.0
    %1408 = vmatprep.subr.mxu0 0.0
    %1409 = vmatpush1.msra.mxu0 0.0
    %1410 = vmatprep.subr.mxu0 0.0
    %1411 = vmatpush1.msra.mxu0 0.0
    %1412 = vmatprep.subr.mxu0 0.0
    %1413 = vmatpush1.msra.mxu0 0.0
    %1414 = vmatprep.subr.mxu0 0.0
    %1415 = vmatpush1.msra.mxu0 0.0
    %1416 = vmatprep.subr.mxu0 0.0
    %1417 = vmatpush1.msra.mxu0 0.0
    %1418 = vmatprep.subr.mxu0 0.0
    %1419 = vmatpush1.msra.mxu0 0.0
    %1420 = vmatprep.subr.mxu0 0.0
    %1421 = vmatpush1.msra.mxu0 0.0
    %1422 = vmatprep.subr.mxu0 0.0
    %1423 = vmatpush1.msra.mxu0 0.0
    %1424 = vmatprep.mubr.f32.mxu0 0.0
    %1425 = vmatmul.mubr.f32.gmra.mrb[0].mxu0 %v1283
    %v1426 = vpop.f32.mrb[0].mxu0
    %v1427 = vadd.f32 0.0, %v1426
    %v1428 = vpop.f32.mrb[0].mxu0
    %1429 = vdwg.mxu0
    %v1430 = vadd.f32 %v1288, %v1356
    %v1431 = vxor.u32 %v1430, 2147483648
    %v1432 = vmul.f32 %v1431, 1.442695
    %v1433 = vpow.pop %v1432
    %v1434 = vadd.f32 %v1433, 1.0
    %v1435 = vrcp.pop %v1434
    %v1436 = vmul.f32 1.0, %v1435
    %v1438 = vrot.slane %v1288, 2
    %v1440 = vadd.f32 %v1438, %v1358
    %v1441 = vxor.u32 %v1440, 2147483648
    %v1442 = vmul.f32 %v1441, 1.442695
    %v1443 = vpow.pop %v1442
    %v1444 = vadd.f32 %v1443, 1.0
    %v1445 = vrcp.pop %v1444
    %v1446 = vmul.f32 1.0, %v1445
    %v1447 = vadd.f32 %v1427, %v235
    %v1448 = vmul.f32 %v1436, %v1447
    %v1449 = vrot.slane %v1288, 4
    %v1451 = vadd.f32 %v1449, %v1448
    %v1452 = vtanh.pop %v1451
    %v1453 = vsub.f32 1.0, %v1446
    %v1454 = vmul.f32 %v1453, %v1452
    %v1455 = vmul.f32 %v1446, %v1283
    %v1456 = vadd.f32 %v1454, %v1455
    %v1457 = vmax.f32 %v1456, 0.0
    %s1458 = scalar_lea.vmem %s3, 14
    %1459 = vst [vmem:[%s1458] sm:$0x3] %v1457
    %1460 = vst [vmem:[#allocation2] sm:$0x3] %v1456
    // Predicated region
    $region18: #{recovery_net_forward.1} parent=1 // pred_check
      %p1461 = pneg %p17
    $region19: #{recovery_net_forward.1} parent=1 // pred_check_branch
      %1463 = sbr.rel (%p1461) target = $region21
    $region20: #{recovery_net_forward.1} parent=1 // pred_region
      %1464 = vst [vmem:[#allocation3] sm:$0x3] %v1456
    $region21: #{recovery_net_forward.1} parent=1 // pred_fallthru
      _
    // Predicated region
    $region22: #{recovery_net_forward.1} parent=1 // pred_check
      _
    $region23: #{recovery_net_forward.1} parent=1 // pred_check_branch
      %1466 = sbr.rel (0) target = $region25
    $region24: #{recovery_net_forward.1} parent=1 // pred_region
      _
    $region25: #{recovery_net_forward.1} parent=1 // pred_fallthru
      _
    // Predicated region
    $region26: #{recovery_net_forward.1} parent=1 // pred_check
      _
    $region27: #{recovery_net_forward.1} parent=1 // pred_check_branch
      %1468 = sbr.rel (0) target = $region29
    $region28: #{recovery_net_forward.1} parent=1 // pred_region
      %s1470 = ssub.s32 32, 32
      %1471 = vsyncadd [#allocation4], %s1470
      %s1473 = sshll.u32 [#allocation3], 4
      %s1474 = int_to_ptr.vmem [resolvable:$true] %s1473
      %1476 = dma.vmem_to_hbm [thread:$0]  %s1474, 32, %s4, [#allocation4]
    $region29: #{recovery_net_forward.1} parent=1 // pred_fallthru
      _
    // Predicated region
    $region30: #{recovery_net_forward.1} parent=1 // pred_check
      _
    $region31: #{recovery_net_forward.1} parent=1 // pred_check_branch
      %1478 = sbr.rel (0) target = $region33
    $region32: #{recovery_net_forward.1} parent=1 // pred_region
      _
    $region33: #{recovery_net_forward.1} parent=1 // pred_fallthru
      _
    // Predicated region
    $region34: #{recovery_net_forward.1} parent=1 // pred_check
      _
    $region35: #{recovery_net_forward.1} parent=1 // pred_check_branch
      %1480 = sbr.rel (0) target = $region37
    $region36: #{recovery_net_forward.1} parent=1 // pred_region
      %1481 = dma.done [#allocation4], 32
    $region37: #{recovery_net_forward.1} parent=1 // pred_fallthru
      _
    %1482 = vsyncpa [#allocation4], 1

</llo_original>
